<compile_context>
chip_gen: v7x
topology: tpu7x:2x2x1
jax: 0.10.0
libtpu: 0.0.40
codegen_flags: <defaults>
</compile_context>

<pallas_src>
import jax
import jax.numpy as jnp
from jax.experimental import pallas as pl
from jax.experimental.pallas import tpu as pltpu

# ---------------------------------------------------------------------------
# Small synthetic config consistent with the module's __init__
# ---------------------------------------------------------------------------
B = 2            # batch
L = 8            # sequence length
S = 4            # obs_info.num_tokens
D_IN = 16        # obs_info.dim        (per-token obs dim)
D_HID = 32       # obs_info.dim_hidden
CHOICES = (5, 3) # action_info.choices (multi-discrete categories)
C = len(CHOICES)
D_ACT = 8        # action_info.dim     (embedding dim per category)
DIM = 32         # `dim` (core model hidden dim)
DEPTH = 2        # core model depth (wavefront below is specialized to 2)
N = B * L        # total rows (time-major: row = t*B + b)

# packed-slab layout constants ------------------------------------------------
FEAT_W = S * D_HID            # 128 : block-diag feature columns
LERP_W = 256                  # fused lerp matmul width (feat 0:128, logits 128:132)
HEAD_W = 128                  # lane-dense padded obs_hat width (true width S*D_IN=64)

ROW_WPO = 0                   # proj weight, obs part        (D_HID  rows)
ROW_WPA = ROW_WPO + D_HID     # proj weight, action part     (C*D_ACT rows)
ROW_WIH = ROW_WPA + C * D_ACT # [wih0 | wih1]                (DIM rows)
ROW_REC = ROW_WIH + DIM       # wavefront recurrence weight  (2*DIM rows)
ROW_WH = ROW_REC + 2 * DIM    # padded head weight           (DIM rows)
WSM_ROWS = ROW_WH + DIM       # = 176 (multiple of 8)

COL_BP = 160                  # projection bias
COL_BC = 192                  # [bc0 | bc1]
COL_BH = 256                  # padded head bias (128 lanes)
B_COLS = 384                  # bias slab width (3 * 128)


# ---------------------------------------------------------------------------
# Fused kernel: lerp -> projection -> DEPTH=2 wavefront residual tanh-RNN -> head
# ---------------------------------------------------------------------------
def _fused_kernel(obs_ref, act_ref, h_ref, wlerp_ref, wsm_ref, b_ref,
                  obs_hat_ref, hn_ref, y_s):
    f32 = jnp.float32

    # ---- LerpStackedFeatures: ONE fused matmul gives features AND logits ----
    obs = obs_ref[...]                                               # (N, S*D_IN)
    lerp = jnp.dot(obs, wlerp_ref[...],
                   preferred_element_type=f32) + b_ref[:, :LERP_W]   # (N, 256)
    feat = lerp[:, :FEAT_W]                                          # (N, S*D_HID)
    logits = lerp[:, FEAT_W:FEAT_W + S]                              # (N, S)
    m = jnp.max(logits, axis=-1, keepdims=True)
    e = jnp.exp(logits - m)
    coef = e / jnp.sum(e, axis=-1, keepdims=True)                    # softmax (N, S)

    obs_flat = coef[:, 0:1] * feat[:, 0:D_HID]
    for s in range(1, S):                                            # VPU, static unroll
        obs_flat = obs_flat + coef[:, s:s + 1] * feat[:, s * D_HID:(s + 1) * D_HID]

    # ---- obs_action_projection (split weights, no concat materialized) ------
    wpo = wsm_ref[ROW_WPO:ROW_WPO + D_HID, 0:DIM]                    # (D_HID, DIM)
    wpa = wsm_ref[ROW_WPA:ROW_WPA + C * D_ACT, 0:DIM]                # (C*D_ACT, DIM)
    x_all = (jnp.dot(obs_flat, wpo, preferred_element_type=f32)
             + jnp.dot(act_ref[...], wpa, preferred_element_type=f32)
             + b_ref[:, COL_BP:COL_BP + DIM])                        # (N, DIM)

    # ---- core model: DEPTH=2 wavefront residual tanh-RNN --------------------
    # xpre[:, 0:DIM]    = x[t] @ wih0 + bc0   (layer-0 drive at t)
    # xpre[:, DIM:2DIM] = x[t] @ wih1 + bc1   (layer-1 drive at t; consumed at t+1)
    wih_cat = wsm_ref[ROW_WIH:ROW_WIH + DIM, 0:2 * DIM]              # [wih0 | wih1]
    w_rec = wsm_ref[ROW_REC:ROW_REC + 2 * DIM, 0:2 * DIM]            # [[whh0, wih1],[0, whh1]]
    xpre = (jnp.dot(x_all, wih_cat, preferred_element_type=f32)
            + b_ref[:, COL_BC:COL_BC + 2 * DIM])                     # (N, 2*DIM)

    lane = jax.lax.broadcasted_iota(jnp.int32, (B, 2 * DIM), 1)
    m0 = (lane < DIM).astype(f32)                                    # layer-0 lanes
    m1 = 1.0 - m0                                                    # layer-1 lanes

    H = h_ref[...]                                                   # (B, 2*DIM): [h0 | h1]
    h_steps = []                                                     # H after each wave step

    # wave step 0: only layer 0 is valid -> keep h1 = init in the right half
    full0 = jnp.tanh(jnp.dot(H, w_rec, preferred_element_type=f32)
                     + xpre[0:B, :] * m0)
    H = m0 * full0 + m1 * H
    h_steps.append(H)

    # wave steps 1..L-1: layer 0 advances to t=w, layer 1 to t=w-1, one matmul
    for w in range(1, L):
        u = xpre[w * B:(w + 1) * B, :] * m0 + xpre[(w - 1) * B:w * B, :] * m1
        H = jnp.tanh(jnp.dot(H, w_rec, preferred_element_type=f32) + u)
        h_steps.append(H)

    # wave step L: only layer 1 is valid -> keep final h0 in the left half
    fullL = jnp.tanh(jnp.dot(H, w_rec, preferred_element_type=f32)
                     + xpre[(L - 1) * B:L * B, :] * m1)
    h_last = m0 * H + m1 * fullL                                     # [h0_final | h1_final]
    hn_ref[...] = h_last
    h_steps.append(h_last)

    # residual core outputs: y[t] = x[t] + h0[t] + h1[t]
    # (written to scratch ONCE, after the serial chain — nothing gates the recurrence)
    for t in range(L):
        y_s[t * B:(t + 1) * B, :] = (x_all[t * B:(t + 1) * B, :]
                                     + h_steps[t][:, 0:DIM]
                                     + h_steps[t + 1][:, DIM:2 * DIM])

    # ---- obs_hat_head: lane-dense padded (N, 128) output ---------------------
    wh_pad = wsm_ref[ROW_WH:ROW_WH + DIM, :]                         # (DIM, 128)
    obs_hat_ref[...] = (jnp.dot(y_s[...], wh_pad, preferred_element_type=f32)
                        + b_ref[:, COL_BH:COL_BH + HEAD_W])


# ---------------------------------------------------------------------------
# Parameter packing (done ONCE at init time — no per-call wrapper glue)
# ---------------------------------------------------------------------------
def pack_params(p):
    f32 = jnp.float32

    # fused lerp weight: block-diag per-token feature weight + logit weight
    w_lerp = jnp.zeros((S * D_IN, LERP_W), f32)
    for s in range(S):
        w_lerp = w_lerp.at[s * D_IN:(s + 1) * D_IN,
                           s * D_HID:(s + 1) * D_HID].set(p["wf"][s])
    w_lerp = w_lerp.at[:, FEAT_W:FEAT_W + S].set(p["wl"])

    # small-weight slab (proj split, wih concat, wavefront recurrence, padded head)
    w_small = jnp.zeros((WSM_ROWS, 128), f32)
    w_small = w_small.at[ROW_WPO:ROW_WPO + D_HID, 0:DIM].set(p["wp"][:D_HID])
    w_small = w_small.at[ROW_WPA:ROW_WPA + C * D_ACT, 0:DIM].set(p["wp"][D_HID:])
    w_small = w_small.at[ROW_WIH:ROW_WIH + DIM, 0:DIM].set(p["wih"][0])
    w_small = w_small.at[ROW_WIH:ROW_WIH + DIM, DIM:2 * DIM].set(p["wih"][1])
    w_small = w_small.at[ROW_REC:ROW_REC + DIM, 0:DIM].set(p["whh"][0])
    w_small = w_small.at[ROW_REC:ROW_REC + DIM, DIM:2 * DIM].set(p["wih"][1])
    w_small = w_small.at[ROW_REC + DIM:ROW_REC + 2 * DIM, DIM:2 * DIM].set(p["whh"][1])
    w_small = w_small.at[ROW_WH:ROW_WH + DIM, 0:S * D_IN].set(p["wh"])

    # one bias slab
    b_all = jnp.zeros((1, B_COLS), f32)
    b_all = b_all.at[0, 0:FEAT_W].set(p["bf"].reshape(-1))
    b_all = b_all.at[0, FEAT_W:FEAT_W + S].set(p["bl"][0])
    b_all = b_all.at[0, COL_BP:COL_BP + DIM].set(p["bp"][0])
    b_all = b_all.at[0, COL_BC:COL_BC + DIM].set(p["bc"][0, 0])
    b_all = b_all.at[0, COL_BC + DIM:COL_BC + 2 * DIM].set(p["bc"][1, 0])
    b_all = b_all.at[0, COL_BH:COL_BH + S * D_IN].set(p["bh"][0])

    offs, acc = [], 0
    for c in CHOICES:
        offs.append(acc)
        acc += c
    return {
        "w_lerp": w_lerp, "w_small": w_small, "b_all": b_all,
        "emb_cat": jnp.concatenate(p["emb"], axis=0),     # fused embedding table
        "emb_off": jnp.array(offs, jnp.int32),
    }


# ---------------------------------------------------------------------------
# Full StackedHiddenFD forward (one Pallas kernel + tiny JAX glue)
# ---------------------------------------------------------------------------
def forward(packed, obs, action, hidden=None):
    Bb, Ll, Ss, Di = obs.shape
    n = Bb * Ll
    if hidden is None:
        hidden = jnp.zeros((Bb, DEPTH, DIM), jnp.float32)

    # time-major rows (row = t*B + b): each timestep's batch rows are contiguous
    obs_tm = obs.transpose(1, 0, 2, 3).reshape(n, Ss * Di)

    # MultiEmbeddings(do_flatten=True): one fused table gather.
    # TODO(synk): embedding index gather stays in JAX glue (tiny data-dependent lookup).
    idx = (action + packed["emb_off"]).transpose(1, 0, 2).reshape(n * C)
    act_tm = jnp.take(packed["emb_cat"], idx, axis=0).reshape(n, C * D_ACT)

    h_init = hidden.reshape(Bb, DEPTH * DIM)                         # [h0 | h1] per row

    obs_hat_pad, hn = pl.pallas_call(
        _fused_kernel,
        out_shape=(jax.ShapeDtypeStruct((n, HEAD_W), jnp.float32),
                   jax.ShapeDtypeStruct((Bb, DEPTH * DIM), jnp.float32)),
        scratch_shapes=[pltpu.VMEM((n, DIM), jnp.float32)],          # core outputs
    )(obs_tm, act_tm, h_init, packed["w_lerp"], packed["w_small"], packed["b_all"])

    obs_hat = obs_hat_pad[:, :Ss * Di].reshape(Ll, Bb, Ss, Di).transpose(1, 0, 2, 3)
    next_hidden = hn.reshape(Bb, DEPTH, DIM)
    return obs_hat, next_hidden


# ---------------------------------------------------------------------------
# Pure-JAX reference (same math, full f32 precision) for the correctness check
# ---------------------------------------------------------------------------
def reference_forward(params, obs, action, hidden):
    hi = jax.lax.Precision.HIGHEST
    Bb, Ll, Ss, Di = obs.shape
    n = Bb * Ll
    obs3 = obs.reshape(n, Ss, Di)
    logits = jnp.dot(obs3.reshape(n, Ss * Di), params["wl"], precision=hi) + params["bl"][0]
    coef = jax.nn.softmax(logits, axis=-1)
    feat = jnp.einsum("sio,nsi->nso", params["wf"], obs3, precision=hi) + params["bf"][None]
    obs_flat = jnp.einsum("ns,nso->no", coef, feat, precision=hi)
    embs = [params["emb"][c][action[..., c]] for c in range(C)]
    act_flat = jnp.concatenate(embs, axis=-1).reshape(n, C * D_ACT)
    x = (jnp.dot(jnp.concatenate([obs_flat, act_flat], axis=-1), params["wp"], precision=hi)
         + params["bp"][0])
    x = x.reshape(Bb, Ll, DIM)
    hs = []
    for d in range(DEPTH):
        hd = hidden[:, d, :]
        outs = []
        for t in range(Ll):
            xt = x[:, t, :]
            hd = jnp.tanh(jnp.dot(xt, params["wih"][d], precision=hi)
                          + jnp.dot(hd, params["whh"][d], precision=hi)
                          + params["bc"][d, 0])
            outs.append(xt + hd)
        x = jnp.stack(outs, axis=1)
        hs.append(hd)
    next_hidden = jnp.stack(hs, axis=1)
    obs_hat = (jnp.dot(x.reshape(n, DIM), params["wh"], precision=hi)
               + params["bh"][0]).reshape(Bb, Ll, Ss, Di)
    return obs_hat, next_hidden


# ---------------------------------------------------------------------------
# Deterministic parameter init (synthetic — no checkpoint loading)
# ---------------------------------------------------------------------------
def init_params(key):
    ks = jax.random.split(key, 12)

    def nrm(k, shape, scale):
        return (scale * jax.random.normal(k, shape)).astype(jnp.float32)

    emb_keys = jax.random.split(ks[4], C)
    return {
        # LerpStackedFeatures
        "wf": nrm(ks[0], (S, D_IN, D_HID), D_IN ** -0.5),
        "bf": nrm(ks[1], (S, D_HID), D_IN ** -0.5),
        "wl": nrm(ks[2], (S * D_IN, S), (S * D_IN) ** -0.5),
        "bl": nrm(ks[3], (1, S), 0.01),
        # MultiEmbeddings
        "emb": [nrm(emb_keys[c], (CHOICES[c], D_ACT), 1.0) for c in range(C)],
        # obs_action_projection
        "wp": nrm(ks[5], (D_HID + C * D_ACT, DIM), (D_HID + C * D_ACT) ** -0.5),
        "bp": nrm(ks[6], (1, DIM), 0.01),
        # core model (stacked residual tanh-RNN)
        "wih": nrm(ks[7], (DEPTH, DIM, DIM), DIM ** -0.5),
        "whh": nrm(ks[8], (DEPTH, DIM, DIM), DIM ** -0.5),
        "bc": nrm(ks[9], (DEPTH, 1, DIM), 0.01),
        # obs_hat_head (ToStackedFeatures, weight flattened to (DIM, S*D_IN))
        "wh": nrm(ks[10], (DIM, S * D_IN), DIM ** -0.5),
        "bh": nrm(ks[11], (1, S * D_IN), DIM ** -0.5),
    }


if __name__ == "__main__":
    root = jax.random.PRNGKey(0)
    k_param, k_obs, k_act = jax.random.split(root, 3)

    params = init_params(k_param)
    packed = pack_params(params)                                     # once, at init time

    obs = jax.random.normal(k_obs, (B, L, S, D_IN), dtype=jnp.float32)
    act_keys = jax.random.split(k_act, C)
    action = jnp.concatenate(
        [jax.random.randint(act_keys[c], (B, L, 1), 0, CHOICES[c], dtype=jnp.int32)
         for c in range(C)], axis=-1)                                # (B, L, C)

    fwd = jax.jit(forward)
    obs_hat, next_hidden = fwd(packed, obs, action, None)
    obs_hat = jax.block_until_ready(obs_hat)
    next_hidden = jax.block_until_ready(next_hidden)

    ref_hat, ref_hidden = reference_forward(
        params, obs, action, jnp.zeros((B, DEPTH, DIM), jnp.float32))

    assert obs_hat.shape == (B, L, S, D_IN) and next_hidden.shape == (B, DEPTH, DIM)
    assert jnp.allclose(obs_hat, ref_hat, atol=2e-4, rtol=2e-4)
    assert jnp.allclose(next_hidden, ref_hidden, atol=2e-4, rtol=2e-4)
    print("KERNEL_OK")
</pallas_src>

<mosaic_0001>
module attributes {stable_mosaic.version = 11 : i64} {
  func.func @_fused_kernel(%arg0: memref<16x64xf32, #tpu.memory_space<vmem>>, %arg1: memref<16x16xf32, #tpu.memory_space<vmem>>, %arg2: memref<2x64xf32, #tpu.memory_space<vmem>>, %arg3: memref<64x256xf32, #tpu.memory_space<vmem>>, %arg4: memref<176x128xf32, #tpu.memory_space<vmem>>, %arg5: memref<1x384xf32, #tpu.memory_space<vmem>>, %arg6: memref<16x128xf32, #tpu.memory_space<vmem>>, %arg7: memref<2x64xf32, #tpu.memory_space<vmem>>, %arg8: memref<16x32xf32, #tpu.memory_space<vmem>>) attributes {dimension_semantics = [], scalar_prefetch = 0 : i64, scratch_operands = 1 : i64, tpu.core_type = #tpu.core_type<tc>} {
    %c0 = arith.constant 0 : index
    %c0_0 = arith.constant 0 : index
    %0 = vector.load %arg0[%c0, %c0_0] : memref<16x64xf32, #tpu.memory_space<vmem>>, vector<16x64xf32>
    %c0_1 = arith.constant 0 : index
    %c0_2 = arith.constant 0 : index
    %1 = vector.load %arg3[%c0_1, %c0_2] : memref<64x256xf32, #tpu.memory_space<vmem>>, vector<64x256xf32>
    %cst = arith.constant dense<0.000000e+00> : vector<16x256xf32>
    %2 = tpu.matmul %0, %1, %cst {dimension_numbers = #tpu.dot_dimension_numbers<[1], [0], [0], [1], [0, 0, 1, 1], [], []>} : vector<16x64xf32>, vector<64x256xf32>, vector<16x256xf32> -> vector<16x256xf32>
    %c0_3 = arith.constant 0 : index
    %c0_4 = arith.constant 0 : index
    %3 = vector.load %arg5[%c0_3, %c0_4] : memref<1x384xf32, #tpu.memory_space<vmem>>, vector<1x256xf32>
    %4 = vector.broadcast %3 : vector<1x256xf32> to vector<16x256xf32>
    %5 = arith.addf %2, %4 : vector<16x256xf32>
    %6 = vector.extract_strided_slice %5 {offsets = [0, 0], sizes = [16, 128], strides = [1, 1]} : vector<16x256xf32> to vector<16x128xf32>
    %7 = vector.extract_strided_slice %5 {offsets = [0, 128], sizes = [16, 4], strides = [1, 1]} : vector<16x256xf32> to vector<16x4xf32>
    %cst_5 = arith.constant dense<0xFF800000> : vector<16xf32>
    %8 = vector.multi_reduction <maximumf>, %7, %cst_5 [1] : vector<16x4xf32> to vector<16xf32>
    %9 = vector.shape_cast %8 : vector<16xf32> to vector<16x1xf32>
    %10 = vector.broadcast %9 : vector<16x1xf32> to vector<16x4xf32>
    %11 = arith.subf %7, %10 : vector<16x4xf32>
    %12 = math.exp %11 : vector<16x4xf32>
    %cst_6 = arith.constant dense<0.000000e+00> : vector<16xf32>
    %13 = vector.multi_reduction <add>, %12, %cst_6 [1] : vector<16x4xf32> to vector<16xf32>
    %14 = vector.shape_cast %13 : vector<16xf32> to vector<16x1xf32>
    %15 = vector.broadcast %14 : vector<16x1xf32> to vector<16x4xf32>
    %16 = arith.divf %12, %15 : vector<16x4xf32>
    %17 = vector.extract_strided_slice %16 {offsets = [0, 0], sizes = [16, 1], strides = [1, 1]} : vector<16x4xf32> to vector<16x1xf32>
    %18 = vector.extract_strided_slice %6 {offsets = [0, 0], sizes = [16, 32], strides = [1, 1]} : vector<16x128xf32> to vector<16x32xf32>
    %19 = vector.broadcast %17 : vector<16x1xf32> to vector<16x32xf32>
    %20 = arith.mulf %19, %18 : vector<16x32xf32>
    %21 = vector.extract_strided_slice %16 {offsets = [0, 1], sizes = [16, 1], strides = [1, 1]} : vector<16x4xf32> to vector<16x1xf32>
    %22 = vector.extract_strided_slice %6 {offsets = [0, 32], sizes = [16, 32], strides = [1, 1]} : vector<16x128xf32> to vector<16x32xf32>
    %23 = vector.broadcast %21 : vector<16x1xf32> to vector<16x32xf32>
    %24 = arith.mulf %23, %22 : vector<16x32xf32>
    %25 = arith.addf %20, %24 : vector<16x32xf32>
    %26 = vector.extract_strided_slice %16 {offsets = [0, 2], sizes = [16, 1], strides = [1, 1]} : vector<16x4xf32> to vector<16x1xf32>
    %27 = vector.extract_strided_slice %6 {offsets = [0, 64], sizes = [16, 32], strides = [1, 1]} : vector<16x128xf32> to vector<16x32xf32>
    %28 = vector.broadcast %26 : vector<16x1xf32> to vector<16x32xf32>
    %29 = arith.mulf %28, %27 : vector<16x32xf32>
    %30 = arith.addf %25, %29 : vector<16x32xf32>
    %31 = vector.extract_strided_slice %16 {offsets = [0, 3], sizes = [16, 1], strides = [1, 1]} : vector<16x4xf32> to vector<16x1xf32>
    %32 = vector.extract_strided_slice %6 {offsets = [0, 96], sizes = [16, 32], strides = [1, 1]} : vector<16x128xf32> to vector<16x32xf32>
    %33 = vector.broadcast %31 : vector<16x1xf32> to vector<16x32xf32>
    %34 = arith.mulf %33, %32 : vector<16x32xf32>
    %35 = arith.addf %30, %34 : vector<16x32xf32>
    %c0_7 = arith.constant 0 : index
    %c0_8 = arith.constant 0 : index
    %36 = vector.load %arg4[%c0_7, %c0_8] : memref<176x128xf32, #tpu.memory_space<vmem>>, vector<32x32xf32>
    %c32 = arith.constant 32 : index
    %c0_9 = arith.constant 0 : index
    %37 = vector.load %arg4[%c32, %c0_9] : memref<176x128xf32, #tpu.memory_space<vmem>>, vector<16x32xf32>
    %cst_10 = arith.constant dense<0.000000e+00> : vector<16x32xf32>
    %38 = tpu.matmul %35, %36, %cst_10 {dimension_numbers = #tpu.dot_dimension_numbers<[1], [0], [0], [1], [0, 0, 1, 1], [], []>} : vector<16x32xf32>, vector<32x32xf32>, vector<16x32xf32> -> vector<16x32xf32>
    %c0_11 = arith.constant 0 : index
    %c0_12 = arith.constant 0 : index
    %39 = vector.load %arg1[%c0_11, %c0_12] : memref<16x16xf32, #tpu.memory_space<vmem>>, vector<16x16xf32>
    %cst_13 = arith.constant dense<0.000000e+00> : vector<16x32xf32>
    %40 = tpu.matmul %39, %37, %cst_13 {dimension_numbers = #tpu.dot_dimension_numbers<[1], [0], [0], [1], [0, 0, 1, 1], [], []>} : vector<16x16xf32>, vector<16x32xf32>, vector<16x32xf32> -> vector<16x32xf32>
    %41 = arith.addf %38, %40 : vector<16x32xf32>
    %c0_14 = arith.constant 0 : index
    %c160 = arith.constant 160 : index
    %42 = vector.load %arg5[%c0_14, %c160] : memref<1x384xf32, #tpu.memory_space<vmem>>, vector<1x32xf32>
    %43 = vector.broadcast %42 : vector<1x32xf32> to vector<16x32xf32>
    %44 = arith.addf %41, %43 : vector<16x32xf32>
    %c48 = arith.constant 48 : index
    %c0_15 = arith.constant 0 : index
    %45 = vector.load %arg4[%c48, %c0_15] : memref<176x128xf32, #tpu.memory_space<vmem>>, vector<32x64xf32>
    %c80 = arith.constant 80 : index
    %c0_16 = arith.constant 0 : index
    %46 = vector.load %arg4[%c80, %c0_16] : memref<176x128xf32, #tpu.memory_space<vmem>>, vector<64x64xf32>
    %cst_17 = arith.constant dense<0.000000e+00> : vector<16x64xf32>
    %47 = tpu.matmul %44, %45, %cst_17 {dimension_numbers = #tpu.dot_dimension_numbers<[1], [0], [0], [1], [0, 0, 1, 1], [], []>} : vector<16x32xf32>, vector<32x64xf32>, vector<16x64xf32> -> vector<16x64xf32>
    %c0_18 = arith.constant 0 : index
    %c192 = arith.constant 192 : index
    %48 = vector.load %arg5[%c0_18, %c192] : memref<1x384xf32, #tpu.memory_space<vmem>>, vector<1x64xf32>
    %49 = vector.broadcast %48 : vector<1x64xf32> to vector<16x64xf32>
    %50 = arith.addf %47, %49 : vector<16x64xf32>
    %51 = tpu.iota {dimensions = array<i32: 1>} : vector<2x64xi32>
    %c32_i32 = arith.constant 32 : i32
    %52 = vector.broadcast %c32_i32 : i32 to vector<2x64xi32>
    %53 = arith.cmpi slt, %51, %52 : vector<2x64xi32>
    %54 = arith.extui %53 : vector<2x64xi1> to vector<2x64xi32>
    %55 = arith.sitofp %54 : vector<2x64xi32> to vector<2x64xf32>
    %cst_19 = arith.constant 1.000000e+00 : f32
    %56 = vector.broadcast %cst_19 : f32 to vector<2x64xf32>
    %57 = arith.subf %56, %55 : vector<2x64xf32>
    %c0_20 = arith.constant 0 : index
    %c0_21 = arith.constant 0 : index
    %58 = vector.load %arg2[%c0_20, %c0_21] : memref<2x64xf32, #tpu.memory_space<vmem>>, vector<2x64xf32>
    %cst_22 = arith.constant dense<0.000000e+00> : vector<2x64xf32>
    %59 = tpu.matmul %58, %46, %cst_22 {dimension_numbers = #tpu.dot_dimension_numbers<[1], [0], [0], [1], [0, 0, 1, 1], [], []>} : vector<2x64xf32>, vector<64x64xf32>, vector<2x64xf32> -> vector<2x64xf32>
    %60 = vector.extract_strided_slice %50 {offsets = [0, 0], sizes = [2, 64], strides = [1, 1]} : vector<16x64xf32> to vector<2x64xf32>
    %61 = arith.mulf %60, %55 : vector<2x64xf32>
    %62 = arith.addf %59, %61 : vector<2x64xf32>
    %63 = math.tanh %62 : vector<2x64xf32>
    %64 = arith.mulf %55, %63 : vector<2x64xf32>
    %65 = arith.mulf %57, %58 : vector<2x64xf32>
    %66 = arith.addf %64, %65 : vector<2x64xf32>
    %67 = vector.extract_strided_slice %50 {offsets = [2, 0], sizes = [2, 64], strides = [1, 1]} : vector<16x64xf32> to vector<2x64xf32>
    %68 = arith.mulf %67, %55 : vector<2x64xf32>
    %69 = vector.extract_strided_slice %50 {offsets = [0, 0], sizes = [2, 64], strides = [1, 1]} : vector<16x64xf32> to vector<2x64xf32>
    %70 = arith.mulf %69, %57 : vector<2x64xf32>
    %71 = arith.addf %68, %70 : vector<2x64xf32>
    %cst_23 = arith.constant dense<0.000000e+00> : vector<2x64xf32>
    %72 = tpu.matmul %66, %46, %cst_23 {dimension_numbers = #tpu.dot_dimension_numbers<[1], [0], [0], [1], [0, 0, 1, 1], [], []>} : vector<2x64xf32>, vector<64x64xf32>, vector<2x64xf32> -> vector<2x64xf32>
    %73 = arith.addf %72, %71 : vector<2x64xf32>
    %74 = math.tanh %73 : vector<2x64xf32>
    %75 = vector.extract_strided_slice %50 {offsets = [4, 0], sizes = [2, 64], strides = [1, 1]} : vector<16x64xf32> to vector<2x64xf32>
    %76 = arith.mulf %75, %55 : vector<2x64xf32>
    %77 = vector.extract_strided_slice %50 {offsets = [2, 0], sizes = [2, 64], strides = [1, 1]} : vector<16x64xf32> to vector<2x64xf32>
    %78 = arith.mulf %77, %57 : vector<2x64xf32>
    %79 = arith.addf %76, %78 : vector<2x64xf32>
    %cst_24 = arith.constant dense<0.000000e+00> : vector<2x64xf32>
    %80 = tpu.matmul %74, %46, %cst_24 {dimension_numbers = #tpu.dot_dimension_numbers<[1], [0], [0], [1], [0, 0, 1, 1], [], []>} : vector<2x64xf32>, vector<64x64xf32>, vector<2x64xf32> -> vector<2x64xf32>
    %81 = arith.addf %80, %79 : vector<2x64xf32>
    %82 = math.tanh %81 : vector<2x64xf32>
    %83 = vector.extract_strided_slice %50 {offsets = [6, 0], sizes = [2, 64], strides = [1, 1]} : vector<16x64xf32> to vector<2x64xf32>
    %84 = arith.mulf %83, %55 : vector<2x64xf32>
    %85 = vector.extract_strided_slice %50 {offsets = [4, 0], sizes = [2, 64], strides = [1, 1]} : vector<16x64xf32> to vector<2x64xf32>
    %86 = arith.mulf %85, %57 : vector<2x64xf32>
    %87 = arith.addf %84, %86 : vector<2x64xf32>
    %cst_25 = arith.constant dense<0.000000e+00> : vector<2x64xf32>
    %88 = tpu.matmul %82, %46, %cst_25 {dimension_numbers = #tpu.dot_dimension_numbers<[1], [0], [0], [1], [0, 0, 1, 1], [], []>} : vector<2x64xf32>, vector<64x64xf32>, vector<2x64xf32> -> vector<2x64xf32>
    %89 = arith.addf %88, %87 : vector<2x64xf32>
    %90 = math.tanh %89 : vector<2x64xf32>
    %91 = vector.extract_strided_slice %50 {offsets = [8, 0], sizes = [2, 64], strides = [1, 1]} : vector<16x64xf32> to vector<2x64xf32>
    %92 = arith.mulf %91, %55 : vector<2x64xf32>
    %93 = vector.extract_strided_slice %50 {offsets = [6, 0], sizes = [2, 64], strides = [1, 1]} : vector<16x64xf32> to vector<2x64xf32>
    %94 = arith.mulf %93, %57 : vector<2x64xf32>
    %95 = arith.addf %92, %94 : vector<2x64xf32>
    %cst_26 = arith.constant dense<0.000000e+00> : vector<2x64xf32>
    %96 = tpu.matmul %90, %46, %cst_26 {dimension_numbers = #tpu.dot_dimension_numbers<[1], [0], [0], [1], [0, 0, 1, 1], [], []>} : vector<2x64xf32>, vector<64x64xf32>, vector<2x64xf32> -> vector<2x64xf32>
    %97 = arith.addf %96, %95 : vector<2x64xf32>
    %98 = math.tanh %97 : vector<2x64xf32>
    %99 = vector.extract_strided_slice %50 {offsets = [10, 0], sizes = [2, 64], strides = [1, 1]} : vector<16x64xf32> to vector<2x64xf32>
    %100 = arith.mulf %99, %55 : vector<2x64xf32>
    %101 = vector.extract_strided_slice %50 {offsets = [8, 0], sizes = [2, 64], strides = [1, 1]} : vector<16x64xf32> to vector<2x64xf32>
    %102 = arith.mulf %101, %57 : vector<2x64xf32>
    %103 = arith.addf %100, %102 : vector<2x64xf32>
    %cst_27 = arith.constant dense<0.000000e+00> : vector<2x64xf32>
    %104 = tpu.matmul %98, %46, %cst_27 {dimension_numbers = #tpu.dot_dimension_numbers<[1], [0], [0], [1], [0, 0, 1, 1], [], []>} : vector<2x64xf32>, vector<64x64xf32>, vector<2x64xf32> -> vector<2x64xf32>
    %105 = arith.addf %104, %103 : vector<2x64xf32>
    %106 = math.tanh %105 : vector<2x64xf32>
    %107 = vector.extract_strided_slice %50 {offsets = [12, 0], sizes = [2, 64], strides = [1, 1]} : vector<16x64xf32> to vector<2x64xf32>
    %108 = arith.mulf %107, %55 : vector<2x64xf32>
    %109 = vector.extract_strided_slice %50 {offsets = [10, 0], sizes = [2, 64], strides = [1, 1]} : vector<16x64xf32> to vector<2x64xf32>
    %110 = arith.mulf %109, %57 : vector<2x64xf32>
    %111 = arith.addf %108, %110 : vector<2x64xf32>
    %cst_28 = arith.constant dense<0.000000e+00> : vector<2x64xf32>
    %112 = tpu.matmul %106, %46, %cst_28 {dimension_numbers = #tpu.dot_dimension_numbers<[1], [0], [0], [1], [0, 0, 1, 1], [], []>} : vector<2x64xf32>, vector<64x64xf32>, vector<2x64xf32> -> vector<2x64xf32>
    %113 = arith.addf %112, %111 : vector<2x64xf32>
    %114 = math.tanh %113 : vector<2x64xf32>
    %115 = vector.extract_strided_slice %50 {offsets = [14, 0], sizes = [2, 64], strides = [1, 1]} : vector<16x64xf32> to vector<2x64xf32>
    %116 = arith.mulf %115, %55 : vector<2x64xf32>
    %117 = vector.extract_strided_slice %50 {offsets = [12, 0], sizes = [2, 64], strides = [1, 1]} : vector<16x64xf32> to vector<2x64xf32>
    %118 = arith.mulf %117, %57 : vector<2x64xf32>
    %119 = arith.addf %116, %118 : vector<2x64xf32>
    %cst_29 = arith.constant dense<0.000000e+00> : vector<2x64xf32>
    %120 = tpu.matmul %114, %46, %cst_29 {dimension_numbers = #tpu.dot_dimension_numbers<[1], [0], [0], [1], [0, 0, 1, 1], [], []>} : vector<2x64xf32>, vector<64x64xf32>, vector<2x64xf32> -> vector<2x64xf32>
    %121 = arith.addf %120, %119 : vector<2x64xf32>
    %122 = math.tanh %121 : vector<2x64xf32>
    %cst_30 = arith.constant dense<0.000000e+00> : vector<2x64xf32>
    %123 = tpu.matmul %122, %46, %cst_30 {dimension_numbers = #tpu.dot_dimension_numbers<[1], [0], [0], [1], [0, 0, 1, 1], [], []>} : vector<2x64xf32>, vector<64x64xf32>, vector<2x64xf32> -> vector<2x64xf32>
    %124 = vector.extract_strided_slice %50 {offsets = [14, 0], sizes = [2, 64], strides = [1, 1]} : vector<16x64xf32> to vector<2x64xf32>
    %125 = arith.mulf %124, %57 : vector<2x64xf32>
    %126 = arith.addf %123, %125 : vector<2x64xf32>
    %127 = math.tanh %126 : vector<2x64xf32>
    %128 = arith.mulf %55, %122 : vector<2x64xf32>
    %129 = arith.mulf %57, %127 : vector<2x64xf32>
    %130 = arith.addf %128, %129 : vector<2x64xf32>
    %c0_31 = arith.constant 0 : index
    %c0_32 = arith.constant 0 : index
    %131 = vector.load %arg7[%c0_31, %c0_32] : memref<2x64xf32, #tpu.memory_space<vmem>>, vector<2x64xf32>
    tpu.vector_store %arg7[%c0_31, %c0_32], %130 {strides = array<i32>} : memref<2x64xf32, #tpu.memory_space<vmem>>, vector<2x64xf32>,
    %132 = vector.extract_strided_slice %44 {offsets = [0, 0], sizes = [2, 32], strides = [1, 1]} : vector<16x32xf32> to vector<2x32xf32>
    %133 = vector.extract_strided_slice %66 {offsets = [0, 0], sizes = [2, 32], strides = [1, 1]} : vector<2x64xf32> to vector<2x32xf32>
    %134 = arith.addf %132, %133 : vector<2x32xf32>
    %135 = vector.extract_strided_slice %74 {offsets = [0, 32], sizes = [2, 32], strides = [1, 1]} : vector<2x64xf32> to vector<2x32xf32>
    %136 = arith.addf %134, %135 : vector<2x32xf32>
    %c0_33 = arith.constant 0 : index
    %c0_34 = arith.constant 0 : index
    %137 = vector.load %arg8[%c0_33, %c0_34] : memref<16x32xf32, #tpu.memory_space<vmem>>, vector<2x32xf32>
    tpu.vector_store %arg8[%c0_33, %c0_34], %136 {strides = array<i32>} : memref<16x32xf32, #tpu.memory_space<vmem>>, vector<2x32xf32>,
    %138 = vector.extract_strided_slice %44 {offsets = [2, 0], sizes = [2, 32], strides = [1, 1]} : vector<16x32xf32> to vector<2x32xf32>
    %139 = vector.extract_strided_slice %74 {offsets = [0, 0], sizes = [2, 32], strides = [1, 1]} : vector<2x64xf32> to vector<2x32xf32>
    %140 = arith.addf %138, %139 : vector<2x32xf32>
    %141 = vector.extract_strided_slice %82 {offsets = [0, 32], sizes = [2, 32], strides = [1, 1]} : vector<2x64xf32> to vector<2x32xf32>
    %142 = arith.addf %140, %141 : vector<2x32xf32>
    %c2 = arith.constant 2 : index
    %c0_35 = arith.constant 0 : index
    %143 = vector.load %arg8[%c2, %c0_35] : memref<16x32xf32, #tpu.memory_space<vmem>>, vector<2x32xf32>
    tpu.vector_store %arg8[%c2, %c0_35], %142 {strides = array<i32>} : memref<16x32xf32, #tpu.memory_space<vmem>>, vector<2x32xf32>,
    %144 = vector.extract_strided_slice %44 {offsets = [4, 0], sizes = [2, 32], strides = [1, 1]} : vector<16x32xf32> to vector<2x32xf32>
    %145 = vector.extract_strided_slice %82 {offsets = [0, 0], sizes = [2, 32], strides = [1, 1]} : vector<2x64xf32> to vector<2x32xf32>
    %146 = arith.addf %144, %145 : vector<2x32xf32>
    %147 = vector.extract_strided_slice %90 {offsets = [0, 32], sizes = [2, 32], strides = [1, 1]} : vector<2x64xf32> to vector<2x32xf32>
    %148 = arith.addf %146, %147 : vector<2x32xf32>
    %c4 = arith.constant 4 : index
    %c0_36 = arith.constant 0 : index
    %149 = vector.load %arg8[%c4, %c0_36] : memref<16x32xf32, #tpu.memory_space<vmem>>, vector<2x32xf32>
    tpu.vector_store %arg8[%c4, %c0_36], %148 {strides = array<i32>} : memref<16x32xf32, #tpu.memory_space<vmem>>, vector<2x32xf32>,
    %150 = vector.extract_strided_slice %44 {offsets = [6, 0], sizes = [2, 32], strides = [1, 1]} : vector<16x32xf32> to vector<2x32xf32>
    %151 = vector.extract_strided_slice %90 {offsets = [0, 0], sizes = [2, 32], strides = [1, 1]} : vector<2x64xf32> to vector<2x32xf32>
    %152 = arith.addf %150, %151 : vector<2x32xf32>
    %153 = vector.extract_strided_slice %98 {offsets = [0, 32], sizes = [2, 32], strides = [1, 1]} : vector<2x64xf32> to vector<2x32xf32>
    %154 = arith.addf %152, %153 : vector<2x32xf32>
    %c6 = arith.constant 6 : index
    %c0_37 = arith.constant 0 : index
    %155 = vector.load %arg8[%c6, %c0_37] : memref<16x32xf32, #tpu.memory_space<vmem>>, vector<2x32xf32>
    tpu.vector_store %arg8[%c6, %c0_37], %154 {strides = array<i32>} : memref<16x32xf32, #tpu.memory_space<vmem>>, vector<2x32xf32>,
    %156 = vector.extract_strided_slice %44 {offsets = [8, 0], sizes = [2, 32], strides = [1, 1]} : vector<16x32xf32> to vector<2x32xf32>
    %157 = vector.extract_strided_slice %98 {offsets = [0, 0], sizes = [2, 32], strides = [1, 1]} : vector<2x64xf32> to vector<2x32xf32>
    %158 = arith.addf %156, %157 : vector<2x32xf32>
    %159 = vector.extract_strided_slice %106 {offsets = [0, 32], sizes = [2, 32], strides = [1, 1]} : vector<2x64xf32> to vector<2x32xf32>
    %160 = arith.addf %158, %159 : vector<2x32xf32>
    %c8 = arith.constant 8 : index
    %c0_38 = arith.constant 0 : index
    %161 = vector.load %arg8[%c8, %c0_38] : memref<16x32xf32, #tpu.memory_space<vmem>>, vector<2x32xf32>
    tpu.vector_store %arg8[%c8, %c0_38], %160 {strides = array<i32>} : memref<16x32xf32, #tpu.memory_space<vmem>>, vector<2x32xf32>,
    %162 = vector.extract_strided_slice %44 {offsets = [10, 0], sizes = [2, 32], strides = [1, 1]} : vector<16x32xf32> to vector<2x32xf32>
    %163 = vector.extract_strided_slice %106 {offsets = [0, 0], sizes = [2, 32], strides = [1, 1]} : vector<2x64xf32> to vector<2x32xf32>
    %164 = arith.addf %162, %163 : vector<2x32xf32>
    %165 = vector.extract_strided_slice %114 {offsets = [0, 32], sizes = [2, 32], strides = [1, 1]} : vector<2x64xf32> to vector<2x32xf32>
    %166 = arith.addf %164, %165 : vector<2x32xf32>
    %c10 = arith.constant 10 : index
    %c0_39 = arith.constant 0 : index
    %167 = vector.load %arg8[%c10, %c0_39] : memref<16x32xf32, #tpu.memory_space<vmem>>, vector<2x32xf32>
    tpu.vector_store %arg8[%c10, %c0_39], %166 {strides = array<i32>} : memref<16x32xf32, #tpu.memory_space<vmem>>, vector<2x32xf32>,
    %168 = vector.extract_strided_slice %44 {offsets = [12, 0], sizes = [2, 32], strides = [1, 1]} : vector<16x32xf32> to vector<2x32xf32>
    %169 = vector.extract_strided_slice %114 {offsets = [0, 0], sizes = [2, 32], strides = [1, 1]} : vector<2x64xf32> to vector<2x32xf32>
    %170 = arith.addf %168, %169 : vector<2x32xf32>
    %171 = vector.extract_strided_slice %122 {offsets = [0, 32], sizes = [2, 32], strides = [1, 1]} : vector<2x64xf32> to vector<2x32xf32>
    %172 = arith.addf %170, %171 : vector<2x32xf32>
    %c12 = arith.constant 12 : index
    %c0_40 = arith.constant 0 : index
    %173 = vector.load %arg8[%c12, %c0_40] : memref<16x32xf32, #tpu.memory_space<vmem>>, vector<2x32xf32>
    tpu.vector_store %arg8[%c12, %c0_40], %172 {strides = array<i32>} : memref<16x32xf32, #tpu.memory_space<vmem>>, vector<2x32xf32>,
    %174 = vector.extract_strided_slice %44 {offsets = [14, 0], sizes = [2, 32], strides = [1, 1]} : vector<16x32xf32> to vector<2x32xf32>
    %175 = vector.extract_strided_slice %122 {offsets = [0, 0], sizes = [2, 32], strides = [1, 1]} : vector<2x64xf32> to vector<2x32xf32>
    %176 = arith.addf %174, %175 : vector<2x32xf32>
    %177 = vector.extract_strided_slice %130 {offsets = [0, 32], sizes = [2, 32], strides = [1, 1]} : vector<2x64xf32> to vector<2x32xf32>
    %178 = arith.addf %176, %177 : vector<2x32xf32>
    %c14 = arith.constant 14 : index
    %c0_41 = arith.constant 0 : index
    %179 = vector.load %arg8[%c14, %c0_41] : memref<16x32xf32, #tpu.memory_space<vmem>>, vector<2x32xf32>
    tpu.vector_store %arg8[%c14, %c0_41], %178 {strides = array<i32>} : memref<16x32xf32, #tpu.memory_space<vmem>>, vector<2x32xf32>,
    %c144 = arith.constant 144 : index
    %c0_42 = arith.constant 0 : index
    %180 = vector.load %arg4[%c144, %c0_42] : memref<176x128xf32, #tpu.memory_space<vmem>>, vector<32x128xf32>
    %c0_43 = arith.constant 0 : index
    %c0_44 = arith.constant 0 : index
    %181 = vector.load %arg8[%c0_43, %c0_44] : memref<16x32xf32, #tpu.memory_space<vmem>>, vector<16x32xf32>
    %cst_45 = arith.constant dense<0.000000e+00> : vector<16x128xf32>
    %182 = tpu.matmul %181, %180, %cst_45 {dimension_numbers = #tpu.dot_dimension_numbers<[1], [0], [0], [1], [0, 0, 1, 1], [], []>} : vector<16x32xf32>, vector<32x128xf32>, vector<16x128xf32> -> vector<16x128xf32>
    %c0_46 = arith.constant 0 : index
    %c256 = arith.constant 256 : index
    %183 = vector.load %arg5[%c0_46, %c256] : memref<1x384xf32, #tpu.memory_space<vmem>>, vector<1x128xf32>
    %184 = vector.broadcast %183 : vector<1x128xf32> to vector<16x128xf32>
    %185 = arith.addf %182, %184 : vector<16x128xf32>
    %c0_47 = arith.constant 0 : index
    %c0_48 = arith.constant 0 : index
    %186 = vector.load %arg6[%c0_47, %c0_48] : memref<16x128xf32, #tpu.memory_space<vmem>>, vector<16x128xf32>
    tpu.vector_store %arg6[%c0_47, %c0_48], %185 {strides = array<i32>} : memref<16x128xf32, #tpu.memory_space<vmem>>, vector<16x128xf32>,
    return
  }
}

</mosaic_0001>

<llo_original>
// kernel: forward.1
$region0: #{forward.1}
  #allocation0 [shape = 'u32[]', space=smem, size = 0x4, offset = 0x4, fixed_abs, tag = 'smem constant byte address 0x4 - core index']
  #allocation1 [shape = 'u32[144,128]{1,0:T(1,128)}', space=vmem, size = 0x12000, scoped, tag = 'internal scratch']
  #allocation2 [shape = 'f32[16,32]{1,0:T(8,128)}', space=vmem, size = 0x2000, scoped, tag = 'scratch operand']
  %s0 = inlined_call_operand.vmem [shape: f32[16,64], index: 0, kind: input, shape index: {}]
  %s1 = inlined_call_operand.vmem [shape: f32[16,16], index: 1, kind: input, shape index: {}]
  %s2 = inlined_call_operand.vmem [shape: f32[2,64], index: 2, kind: input, shape index: {}]
  %s3 = inlined_call_operand.vmem [shape: f32[64,256], index: 3, kind: input, shape index: {}]
  %s4 = inlined_call_operand.vmem [shape: f32[176,128], index: 4, kind: input, shape index: {}]
  %s5 = inlined_call_operand.vmem [shape: f32[1,384], index: 5, kind: input, shape index: {}]
  %s6 = inlined_call_operand.vmem [shape: f32[16,128], index: 6, kind: output, shape index: {0}]
  %s7 = inlined_call_operand.vmem [shape: f32[2,64], index: 7, kind: output, shape index: {1}]
  %8 = xla_tuple %s6, %s7
  %s9 = sld [smem:[#allocation0]]
  $region42: #{forward.1} parent=0
    _
  %s11 = ssub.s32 1, %s9
  %s12 = scalar_select 0, %s11, %s9
  // Predicated region
  $region2: #{forward.1} parent=0 // pred_check
    _
  $region3: #{forward.1} parent=0 // pred_check_branch
    %14 = sbr.rel (0) target = $region5
  $region4: #{forward.1} parent=0 // pred_region
    _
  $region5: #{forward.1} parent=0 // pred_fallthru
    _
  // Predicated region
  $region6: #{forward.1} parent=0 // pred_check
    _
  $region7: #{forward.1} parent=0 // pred_check_branch
    %16 = sbr.rel (0) target = $region9
  $region8: #{forward.1} parent=0 // pred_region
    _
  $region9: #{forward.1} parent=0 // pred_fallthru
    _
  // Predicated region
  $region10: #{forward.1} parent=0 // pred_check
    _
  $region11: #{forward.1} parent=0 // pred_check_branch
    %18 = sbr.rel (0) target = $region13
  $region12: #{forward.1} parent=0 // pred_region
    _
  $region13: #{forward.1} parent=0 // pred_fallthru
    _
  // Predicated region
  $region14: #{forward.1} parent=0 // pred_check
    _
  $region15: #{forward.1} parent=0 // pred_check_branch
    %20 = sbr.rel (0) target = $region17
  $region16: #{forward.1} parent=0 // pred_region
    _
  $region17: #{forward.1} parent=0 // pred_fallthru
    _
  // Predicated region
  $region18: #{forward.1} parent=0 // pred_check
    _
  $region19: #{forward.1} parent=0 // pred_check_branch
    %22 = sbr.rel (0) target = $region21
  $region20: #{forward.1} parent=0 // pred_region
    _
  $region21: #{forward.1} parent=0 // pred_fallthru
    _
  // Predicated region
  $region22: #{forward.1} parent=0 // pred_check
    _
  $region23: #{forward.1} parent=0 // pred_check_branch
    %24 = sbr.rel (0) target = $region25
  $region24: #{forward.1} parent=0 // pred_region
    _
  $region25: #{forward.1} parent=0 // pred_fallthru
    _
  %v25 = vld [vmem:[%s0] sm:$0xff]
  %v26 = vld [vmem:[%s0 + $0x8] sm:$0xff]
  %v27 = vld [vmem:[%s3] sm:$0xff]
  %v28 = vld [vmem:[%s3 + $0x8] sm:$0xff]
  %v29 = vld [vmem:[%s3 + $0x10] sm:$0xff]
  %v30 = vld [vmem:[%s3 + $0x18] sm:$0xff]
  %v31 = vld [vmem:[%s3 + $0x20] sm:$0xff]
  %v32 = vld [vmem:[%s3 + $0x28] sm:$0xff]
  %v33 = vld [vmem:[%s3 + $0x30] sm:$0xff]
  %v34 = vld [vmem:[%s3 + $0x38] sm:$0xff]
  %v35 = vld [vmem:[%s3 + $0x40] sm:$0xff]
  %v36 = vld [vmem:[%s3 + $0x48] sm:$0xff]
  %v37 = vld [vmem:[%s3 + $0x50] sm:$0xff]
  %v38 = vld [vmem:[%s3 + $0x58] sm:$0xff]
  %v39 = vld [vmem:[%s3 + $0x60] sm:$0xff]
  %v40 = vld [vmem:[%s3 + $0x68] sm:$0xff]
  %v41 = vld [vmem:[%s3 + $0x70] sm:$0xff]
  %v42 = vld [vmem:[%s3 + $0x78] sm:$0xff]
  %v43 = vld [vmem:[%s5] sm:$0x3]
  %v45 = vlaneseq
  %v46 = vshrl.u32 %v45, 7
  %v47 = vsub.s32 0, %v46
  %v48 = vrot.slane %v43, %v47
  %v49 = vlaneseq
  %v50 = vshrl.u32 %v49, 7
  %v51 = vsub.s32 1, %v50
  %v52 = vrot.slane %v43, %v51
  %vm55 = vcmask 523264
  %v57 = vsel %vm55, %v25, 0
  %v60 = vsel %vm55, %v26, 0
  %62 = vmatprep.subr.mxu0 %v28
  %63 = vmatpush1.msra.mxu0 %v27
  %64 = vmatprep.subr.mxu0 %v30
  %65 = vmatpush1.msra.mxu0 %v29
  %66 = vmatprep.subr.mxu0 %v32
  %67 = vmatpush1.msra.mxu0 %v31
  %68 = vmatprep.subr.mxu0 %v34
  %69 = vmatpush1.msra.mxu0 %v33
  %70 = vmatprep.subr.mxu0 %v36
  %71 = vmatpush1.msra.mxu0 %v35
  %72 = vmatprep.subr.mxu0 %v38
  %73 = vmatpush1.msra.mxu0 %v37
  %74 = vmatprep.subr.mxu0 %v40
  %75 = vmatpush1.msra.mxu0 %v39
  %76 = vmatprep.subr.mxu0 %v42
  %77 = vmatpush1.msra.mxu0 %v41
  %78 = vmatprep.subr.mxu0 0.0
  %79 = vmatpush1.msra.mxu0 0.0
  %80 = vmatprep.subr.mxu0 0.0
  %81 = vmatpush1.msra.mxu0 0.0
  %82 = vmatprep.subr.mxu0 0.0
  %83 = vmatpush1.msra.mxu0 0.0
  %84 = vmatprep.subr.mxu0 0.0
  %85 = vmatpush1.msra.mxu0 0.0
  %86 = vmatprep.subr.mxu0 0.0
  %87 = vmatpush1.msra.mxu0 0.0
  %88 = vmatprep.subr.mxu0 0.0
  %89 = vmatpush1.msra.mxu0 0.0
  %90 = vmatprep.subr.mxu0 0.0
  %91 = vmatpush1.msra.mxu0 0.0
  %92 = vmatprep.subr.mxu0 0.0
  %93 = vmatpush1.msra.mxu0 0.0
  %94 = vmatprep.subr.mxu0 0.0
  %95 = vmatpush1.msra.mxu0 0.0
  %96 = vmatprep.subr.mxu0 0.0
  %97 = vmatpush1.msra.mxu0 0.0
  %98 = vmatprep.subr.mxu0 0.0
  %99 = vmatpush1.msra.mxu0 0.0
  %100 = vmatprep.subr.mxu0 0.0
  %101 = vmatpush1.msra.mxu0 0.0
  %102 = vmatprep.subr.mxu0 0.0
  %103 = vmatpush1.msra.mxu0 0.0
  %104 = vmatprep.subr.mxu0 0.0
  %105 = vmatpush1.msra.mxu0 0.0
  %106 = vmatprep.subr.mxu0 0.0
  %107 = vmatpush1.msra.mxu0 0.0
  %108 = vmatprep.subr.mxu0 0.0
  %109 = vmatpush1.msra.mxu0 0.0
  %110 = vmatprep.subr.mxu0 0.0
  %111 = vmatpush1.msra.mxu0 0.0
  %112 = vmatprep.subr.mxu0 0.0
  %113 = vmatpush1.msra.mxu0 0.0
  %114 = vmatprep.subr.mxu0 0.0
  %115 = vmatpush1.msra.mxu0 0.0
  %116 = vmatprep.subr.mxu0 0.0
  %117 = vmatpush1.msra.mxu0 0.0
  %118 = vmatprep.subr.mxu0 0.0
  %119 = vmatpush1.msra.mxu0 0.0
  %120 = vmatprep.subr.mxu0 0.0
  %121 = vmatpush1.msra.mxu0 0.0
  %122 = vmatprep.subr.mxu0 0.0
  %123 = vmatpush1.msra.mxu0 0.0
  %124 = vmatprep.subr.mxu0 0.0
  %125 = vmatpush1.msra.mxu0 0.0
  %126 = vmatprep.mubr.f32.mxu0 0.0
  %127 = vmatmul.mubr.f32.gmra.mrb[0].mxu0 %v57
  %v128 = vpop.f32.mrb[0].mxu0
  %v129 = vadd.f32 %v48, %v128
  %v130 = vpop.f32.mrb[0].mxu0
  %v131 = vadd.f32 %v52, %v130
  %132 = vmatprep.mubr.f32.mxu0 0.0
  %133 = vmatmul.mubr.f32.gmra.mrb[0].mxu0 %v60
  %v134 = vpop.f32.mrb[0].mxu0
  %v135 = vadd.f32 %v48, %v134
  %v136 = vpop.f32.mrb[0].mxu0
  %v137 = vadd.f32 %v52, %v136
  %138 = vdwg.mxu0
  %vm139 = vcmask 31744
  %v140 = vsel %vm139, %v131, -inf
  %141 = vmax.xlane.f32.xlu0 %v140
  %v142 = vpop.xlane.xlu0 %141
  %v143 = vsel %vm139, %v137, -inf
  %144 = vmax.xlane.f32.xlu0 %v143
  %v145 = vpop.xlane.xlu0 %144
  %v146 = vsub.f32 %v131, %v142
  %v147 = vsub.f32 %v137, %v145
  %v148 = vmul.f32 %v146, 1.442695
  %v149 = vpow.pop %v148
  %v150 = vmul.f32 %v147, 1.442695
  %v151 = vpow.pop %v150
  %v152 = vsel %vm139, %v149, 0.0
  %153 = vadd.xlane.f32.xlu0 %v152
  %v154 = vpop.xlane.xlu0 %153
  %v155 = vsel %vm139, %v151, 0.0
  %156 = vadd.xlane.f32.xlu0 %v155
  %v157 = vpop.xlane.xlu0 %156
  %v158 = vrcp.pop %v154
  %v159 = vmul.f32 %v149, %v158
  %v160 = vrcp.pop %v157
  %v161 = vmul.f32 %v151, %v160
  %163 = vset.pattern.permute.xlu0 0
  %164 = vperm.xlu0 %163, %v159
  %v165 = vpop.permute.xlu0 %164
  %168 = vset.pattern.permute.xlu0 0
  %169 = vperm.xlu0 %168, %v161
  %v170 = vpop.permute.xlu0 %169
  %v172 = vmul.f32 %v165, %v129
  %v173 = vmul.f32 %v170, %v135
  %174 = vset.pattern.permute.xlu0 1
  %175 = vperm.xlu0 %174, %v159
  %v176 = vpop.permute.xlu0 %175
  %178 = vset.pattern.permute.xlu0 1
  %179 = vperm.xlu0 %178, %v161
  %v180 = vpop.permute.xlu0 %179
  %v182 = vmul.f32 %v176, %v129
  %v183 = vmul.f32 %v180, %v135
  %186 = vrot.lane.b32.xlu0 %v182, 96
  %v187 = vpop.permute.xlu0 %186
  %188 = vrot.lane.b32.xlu0 %v183, 96
  %v189 = vpop.permute.xlu0 %188
  %v192 = vadd.f32 %v172, %v187
  %v193 = vadd.f32 %v173, %v189
  %194 = vset.pattern.permute.xlu0 2
  %195 = vperm.xlu0 %194, %v159
  %v196 = vpop.permute.xlu0 %195
  %198 = vset.pattern.permute.xlu0 2
  %199 = vperm.xlu0 %198, %v161
  %v200 = vpop.permute.xlu0 %199
  %v202 = vmul.f32 %v196, %v129
  %v203 = vmul.f32 %v200, %v135
  %206 = vrot.lane.b32.xlu0 %v202, 64
  %v207 = vpop.permute.xlu0 %206
  %208 = vrot.lane.b32.xlu0 %v203, 64
  %v209 = vpop.permute.xlu0 %208
  %v212 = vadd.f32 %v192, %v207
  %v213 = vadd.f32 %v193, %v209
  %214 = vset.pattern.permute.xlu0 3
  %215 = vperm.xlu0 %214, %v159
  %v216 = vpop.permute.xlu0 %215
  %218 = vset.pattern.permute.xlu0 3
  %219 = vperm.xlu0 %218, %v161
  %v220 = vpop.permute.xlu0 %219
  %v222 = vmul.f32 %v216, %v129
  %v223 = vmul.f32 %v220, %v135
  %226 = vrot.lane.b32.xlu0 %v222, 32
  %v227 = vpop.permute.xlu0 %226
  %228 = vrot.lane.b32.xlu0 %v223, 32
  %v229 = vpop.permute.xlu0 %228
  %v232 = vadd.f32 %v212, %v227
  %v233 = vadd.f32 %v213, %v229
  %v234 = vld [vmem:[%s4] sm:$0xff]
  %v235 = vld [vmem:[%s4 + $0x8] sm:$0xff]
  %v236 = vld [vmem:[%s4 + $0x10] sm:$0xff]
  %v237 = vld [vmem:[%s4 + $0x18] sm:$0xff]
  %v238 = vld [vmem:[%s4 + $0x20] sm:$0xff]
  %v239 = vld [vmem:[%s4 + $0x28] sm:$0xff]
  %v240 = vld [vmem:[%s1] sm:$0xff]
  %v241 = vld [vmem:[%s1 + $0x8] sm:$0xff]
  %vm242 = vcmask 130048
  %v244 = vsel %vm242, %v240, 0
  %v247 = vsel %vm242, %v241, 0
  %249 = vmatprep.subr.mxu0 0.0
  %250 = vmatpush1.msra.mxu0 %v238
  %251 = vmatprep.subr.mxu0 0.0
  %252 = vmatpush1.msra.mxu0 %v239
  %253 = vmatprep.subr.mxu0 0.0
  %254 = vmatpush1.msra.mxu0 0.0
  %255 = vmatprep.subr.mxu0 0.0
  %256 = vmatpush1.msra.mxu0 0.0
  %257 = vmatprep.subr.mxu0 0.0
  %258 = vmatpush1.msra.mxu0 0.0
  %259 = vmatprep.subr.mxu0 0.0
  %260 = vmatpush1.msra.mxu0 0.0
  %261 = vmatprep.subr.mxu0 0.0
  %262 = vmatpush1.msra.mxu0 0.0
  %263 = vmatprep.subr.mxu0 0.0
  %264 = vmatpush1.msra.mxu0 0.0
  %265 = vmatprep.subr.mxu0 0.0
  %266 = vmatpush1.msra.mxu0 0.0
  %267 = vmatprep.subr.mxu0 0.0
  %268 = vmatpush1.msra.mxu0 0.0
  %269 = vmatprep.subr.mxu0 0.0
  %270 = vmatpush1.msra.mxu0 0.0
  %271 = vmatprep.subr.mxu0 0.0
  %272 = vmatpush1.msra.mxu0 0.0
  %273 = vmatprep.subr.mxu0 0.0
  %274 = vmatpush1.msra.mxu0 0.0
  %275 = vmatprep.subr.mxu0 0.0
  %276 = vmatpush1.msra.mxu0 0.0
  %277 = vmatprep.subr.mxu0 0.0
  %278 = vmatpush1.msra.mxu0 0.0
  %279 = vmatprep.subr.mxu0 0.0
  %280 = vmatpush1.msra.mxu0 0.0
  %281 = vmatprep.subr.mxu0 0.0
  %282 = vmatpush1.msra.mxu0 0.0
  %283 = vmatprep.subr.mxu0 0.0
  %284 = vmatpush1.msra.mxu0 0.0
  %285 = vmatprep.subr.mxu0 0.0
  %286 = vmatpush1.msra.mxu0 0.0
  %287 = vmatprep.subr.mxu0 0.0
  %288 = vmatpush1.msra.mxu0 0.0
  %289 = vmatprep.subr.mxu0 0.0
  %290 = vmatpush1.msra.mxu0 0.0
  %291 = vmatprep.subr.mxu0 0.0
  %292 = vmatpush1.msra.mxu0 0.0
  %293 = vmatprep.subr.mxu0 0.0
  %294 = vmatpush1.msra.mxu0 0.0
  %295 = vmatprep.subr.mxu0 0.0
  %296 = vmatpush1.msra.mxu0 0.0
  %297 = vmatprep.subr.mxu0 0.0
  %298 = vmatpush1.msra.mxu0 0.0
  %299 = vmatprep.subr.mxu0 0.0
  %300 = vmatpush1.msra.mxu0 0.0
  %301 = vmatprep.subr.mxu0 0.0
  %302 = vmatpush1.msra.mxu0 0.0
  %303 = vmatprep.subr.mxu0 0.0
  %304 = vmatpush1.msra.mxu0 0.0
  %305 = vmatprep.subr.mxu0 0.0
  %306 = vmatpush1.msra.mxu0 0.0
  %307 = vmatprep.subr.mxu0 0.0
  %308 = vmatpush1.msra.mxu0 0.0
  %309 = vmatprep.subr.mxu0 0.0
  %310 = vmatpush1.msra.mxu0 0.0
  %311 = vmatprep.subr.mxu0 0.0
  %312 = vmatpush1.msra.mxu0 0.0
  %313 = vmatprep.mubr.f32.mxu0 0.0
  %314 = vmatmul.mubr.f32.gmra.mrb[0].mxu0 %v244
  %v315 = vpop.f32.mrb[0].mxu0
  %v316 = vadd.f32 0.0, %v315
  %v317 = vpop.f32.mrb[0].mxu0
  %318 = vmatprep.mubr.f32.mxu0 0.0
  %319 = vmatmul.mubr.f32.gmra.mrb[0].mxu0 %v247
  %v320 = vpop.f32.mrb[0].mxu0
  %v321 = vadd.f32 0.0, %v320
  %v322 = vpop.f32.mrb[0].mxu0
  %323 = vdwg.mxu0
  %vm324 = vcmask 261120
  %v326 = vsel %vm324, %v232, 0
  %v329 = vsel %vm324, %v233, 0
  %331 = vmatprep.subr.mxu0 0.0
  %332 = vmatpush1.msra.mxu0 %v234
  %333 = vmatprep.subr.mxu0 0.0
  %334 = vmatpush1.msra.mxu0 %v235
  %335 = vmatprep.subr.mxu0 0.0
  %336 = vmatpush1.msra.mxu0 %v236
  %337 = vmatprep.subr.mxu0 0.0
  %338 = vmatpush1.msra.mxu0 %v237
  %339 = vmatprep.subr.mxu0 0.0
  %340 = vmatpush1.msra.mxu0 0.0
  %341 = vmatprep.subr.mxu0 0.0
  %342 = vmatpush1.msra.mxu0 0.0
  %343 = vmatprep.subr.mxu0 0.0
  %344 = vmatpush1.msra.mxu0 0.0
  %345 = vmatprep.subr.mxu0 0.0
  %346 = vmatpush1.msra.mxu0 0.0
  %347 = vmatprep.subr.mxu0 0.0
  %348 = vmatpush1.msra.mxu0 0.0
  %349 = vmatprep.subr.mxu0 0.0
  %350 = vmatpush1.msra.mxu0 0.0
  %351 = vmatprep.subr.mxu0 0.0
  %352 = vmatpush1.msra.mxu0 0.0
  %353 = vmatprep.subr.mxu0 0.0
  %354 = vmatpush1.msra.mxu0 0.0
  %355 = vmatprep.subr.mxu0 0.0
  %356 = vmatpush1.msra.mxu0 0.0
  %357 = vmatprep.subr.mxu0 0.0
  %358 = vmatpush1.msra.mxu0 0.0
  %359 = vmatprep.subr.mxu0 0.0
  %360 = vmatpush1.msra.mxu0 0.0
  %361 = vmatprep.subr.mxu0 0.0
  %362 = vmatpush1.msra.mxu0 0.0
  %363 = vmatprep.subr.mxu0 0.0
  %364 = vmatpush1.msra.mxu0 0.0
  %365 = vmatprep.subr.mxu0 0.0
  %366 = vmatpush1.msra.mxu0 0.0
  %367 = vmatprep.subr.mxu0 0.0
  %368 = vmatpush1.msra.mxu0 0.0
  %369 = vmatprep.subr.mxu0 0.0
  %370 = vmatpush1.msra.mxu0 0.0
  %371 = vmatprep.subr.mxu0 0.0
  %372 = vmatpush1.msra.mxu0 0.0
  %373 = vmatprep.subr.mxu0 0.0
  %374 = vmatpush1.msra.mxu0 0.0
  %375 = vmatprep.subr.mxu0 0.0
  %376 = vmatpush1.msra.mxu0 0.0
  %377 = vmatprep.subr.mxu0 0.0
  %378 = vmatpush1.msra.mxu0 0.0
  %379 = vmatprep.subr.mxu0 0.0
  %380 = vmatpush1.msra.mxu0 0.0
  %381 = vmatprep.subr.mxu0 0.0
  %382 = vmatpush1.msra.mxu0 0.0
  %383 = vmatprep.subr.mxu0 0.0
  %384 = vmatpush1.msra.mxu0 0.0
  %385 = vmatprep.subr.mxu0 0.0
  %386 = vmatpush1.msra.mxu0 0.0
  %387 = vmatprep.subr.mxu0 0.0
  %388 = vmatpush1.msra.mxu0 0.0
  %389 = vmatprep.subr.mxu0 0.0
  %390 = vmatpush1.msra.mxu0 0.0
  %391 = vmatprep.subr.mxu0 0.0
  %392 = vmatpush1.msra.mxu0 0.0
  %393 = vmatprep.subr.mxu0 0.0
  %394 = vmatpush1.msra.mxu0 0.0
  %395 = vmatprep.mubr.f32.mxu0 0.0
  %396 = vmatmul.mubr.f32.gmra.mrb[0].mxu0 %v326
  %v397 = vpop.f32.mrb[0].mxu0
  %v398 = vadd.f32 %v316, %v397
  %v399 = vpop.f32.mrb[0].mxu0
  %400 = vmatprep.mubr.f32.mxu0 0.0
  %401 = vmatmul.mubr.f32.gmra.mrb[0].mxu0 %v329
  %v402 = vpop.f32.mrb[0].mxu0
  %v403 = vadd.f32 %v321, %v402
  %v404 = vpop.f32.mrb[0].mxu0
  %405 = vdwg.mxu0
  %v406 = vld [vmem:[%s5 + $0x1] sm:$0x1]
  %v408 = vlaneseq
  %v409 = vshrl.u32 %v408, 7
  %v410 = vsub.s32 0, %v409
  %v411 = vrot.slane %v406, %v410
  %412 = vrot.lane.b32.xlu0 %v411, 96
  %v413 = vpop.permute.xlu0 %412
  %v415 = vadd.f32 %v398, %v413
  %v416 = vadd.f32 %v403, %v413
  %v417 = vld [vmem:[%s4 + $0x30] sm:$0xff]
  %v418 = vld [vmem:[%s4 + $0x38] sm:$0xff]
  %v419 = vld [vmem:[%s4 + $0x40] sm:$0xff]
  %v420 = vld [vmem:[%s4 + $0x48] sm:$0xff]
  %v421 = vld [vmem:[%s4 + $0x50] sm:$0xff]
  %v422 = vld [vmem:[%s4 + $0x58] sm:$0xff]
  %v423 = vld [vmem:[%s4 + $0x60] sm:$0xff]
  %v424 = vld [vmem:[%s4 + $0x68] sm:$0xff]
  %v425 = vld [vmem:[%s4 + $0x70] sm:$0xff]
  %v426 = vld [vmem:[%s4 + $0x78] sm:$0xff]
  %v427 = vld [vmem:[%s4 + $0x80] sm:$0xff]
  %v428 = vld [vmem:[%s4 + $0x88] sm:$0xff]
  %429 = vrot.lane.b32.xlu0 %v411, 64
  %v430 = vpop.permute.xlu0 %429
  %v433 = vsel %vm324, %v415, 0
  %v436 = vsel %vm324, %v416, 0
  %438 = vmatprep.subr.mxu0 0.0
  %439 = vmatpush1.msra.mxu0 %v417
  %440 = vmatprep.subr.mxu0 0.0
  %441 = vmatpush1.msra.mxu0 %v418
  %442 = vmatprep.subr.mxu0 0.0
  %443 = vmatpush1.msra.mxu0 %v419
  %444 = vmatprep.subr.mxu0 0.0
  %445 = vmatpush1.msra.mxu0 %v420
  %446 = vmatprep.subr.mxu0 0.0
  %447 = vmatpush1.msra.mxu0 0.0
  %448 = vmatprep.subr.mxu0 0.0
  %449 = vmatpush1.msra.mxu0 0.0
  %450 = vmatprep.subr.mxu0 0.0
  %451 = vmatpush1.msra.mxu0 0.0
  %452 = vmatprep.subr.mxu0 0.0
  %453 = vmatpush1.msra.mxu0 0.0
  %454 = vmatprep.subr.mxu0 0.0
  %455 = vmatpush1.msra.mxu0 0.0
  %456 = vmatprep.subr.mxu0 0.0
  %457 = vmatpush1.msra.mxu0 0.0
  %458 = vmatprep.subr.mxu0 0.0
  %459 = vmatpush1.msra.mxu0 0.0
  %460 = vmatprep.subr.mxu0 0.0
  %461 = vmatpush1.msra.mxu0 0.0
  %462 = vmatprep.subr.mxu0 0.0
  %463 = vmatpush1.msra.mxu0 0.0
  %464 = vmatprep.subr.mxu0 0.0
  %465 = vmatpush1.msra.mxu0 0.0
  %466 = vmatprep.subr.mxu0 0.0
  %467 = vmatpush1.msra.mxu0 0.0
  %468 = vmatprep.subr.mxu0 0.0
  %469 = vmatpush1.msra.mxu0 0.0
  %470 = vmatprep.subr.mxu0 0.0
  %471 = vmatpush1.msra.mxu0 0.0
  %472 = vmatprep.subr.mxu0 0.0
  %473 = vmatpush1.msra.mxu0 0.0
  %474 = vmatprep.subr.mxu0 0.0
  %475 = vmatpush1.msra.mxu0 0.0
  %476 = vmatprep.subr.mxu0 0.0
  %477 = vmatpush1.msra.mxu0 0.0
  %478 = vmatprep.subr.mxu0 0.0
  %479 = vmatpush1.msra.mxu0 0.0
  %480 = vmatprep.subr.mxu0 0.0
  %481 = vmatpush1.msra.mxu0 0.0
  %482 = vmatprep.subr.mxu0 0.0
  %483 = vmatpush1.msra.mxu0 0.0
  %484 = vmatprep.subr.mxu0 0.0
  %485 = vmatpush1.msra.mxu0 0.0
  %486 = vmatprep.subr.mxu0 0.0
  %487 = vmatpush1.msra.mxu0 0.0
  %488 = vmatprep.subr.mxu0 0.0
  %489 = vmatpush1.msra.mxu0 0.0
  %490 = vmatprep.subr.mxu0 0.0
  %491 = vmatpush1.msra.mxu0 0.0
  %492 = vmatprep.subr.mxu0 0.0
  %493 = vmatpush1.msra.mxu0 0.0
  %494 = vmatprep.subr.mxu0 0.0
  %495 = vmatpush1.msra.mxu0 0.0
  %496 = vmatprep.subr.mxu0 0.0
  %497 = vmatpush1.msra.mxu0 0.0
  %498 = vmatprep.subr.mxu0 0.0
  %499 = vmatpush1.msra.mxu0 0.0
  %500 = vmatprep.subr.mxu0 0.0
  %501 = vmatpush1.msra.mxu0 0.0
  %502 = vmatprep.mubr.f32.mxu0 0.0
  %503 = vmatmul.mubr.f32.gmra.mrb[0].mxu0 %v433
  %v504 = vpop.f32.mrb[0].mxu0
  %v505 = vadd.f32 %v430, %v504
  %v506 = vpop.f32.mrb[0].mxu0
  %507 = vmatprep.mubr.f32.mxu0 0.0
  %508 = vmatmul.mubr.f32.gmra.mrb[0].mxu0 %v436
  %v509 = vpop.f32.mrb[0].mxu0
  %v510 = vadd.f32 %v430, %v509
  %v511 = vpop.f32.mrb[0].mxu0
  %512 = vdwg.mxu0
  %v513 = vlaneseq
  %v514 = vand.u32 %v513, 127
  %vm515 = vcmp.lt.s32.totalorder %v514, 32
  %v516 = vsel %vm515, 1, 0
  %v517 = vcvt.s32.f32 %v516
  %v518 = vsub.f32 1.0, %v517
  %v519 = vld [vmem:[%s2] sm:$0x3]
  %v520 = vmul.f32 %v505, %v517
  %v522 = vsel %vm55, %v519, 0
  %524 = vmatprep.subr.mxu0 0.0
  %525 = vmatpush1.msra.mxu0 %v421
  %526 = vmatprep.subr.mxu0 0.0
  %527 = vmatpush1.msra.mxu0 %v422
  %528 = vmatprep.subr.mxu0 0.0
  %529 = vmatpush1.msra.mxu0 %v423
  %530 = vmatprep.subr.mxu0 0.0
  %531 = vmatpush1.msra.mxu0 %v424
  %532 = vmatprep.subr.mxu0 0.0
  %533 = vmatpush1.msra.mxu0 %v425
  %534 = vmatprep.subr.mxu0 0.0
  %535 = vmatpush1.msra.mxu0 %v426
  %536 = vmatprep.subr.mxu0 0.0
  %537 = vmatpush1.msra.mxu0 %v427
  %538 = vmatprep.subr.mxu0 0.0
  %539 = vmatpush1.msra.mxu0 %v428
  %540 = vmatprep.subr.mxu0 0.0
  %541 = vmatpush1.msra.mxu0 0.0
  %542 = vmatprep.subr.mxu0 0.0
  %543 = vmatpush1.msra.mxu0 0.0
  %544 = vmatprep.subr.mxu0 0.0
  %545 = vmatpush1.msra.mxu0 0.0
  %546 = vmatprep.subr.mxu0 0.0
  %547 = vmatpush1.msra.mxu0 0.0
  %548 = vmatprep.subr.mxu0 0.0
  %549 = vmatpush1.msra.mxu0 0.0
  %550 = vmatprep.subr.mxu0 0.0
  %551 = vmatpush1.msra.mxu0 0.0
  %552 = vmatprep.subr.mxu0 0.0
  %553 = vmatpush1.msra.mxu0 0.0
  %554 = vmatprep.subr.mxu0 0.0
  %555 = vmatpush1.msra.mxu0 0.0
  %556 = vmatprep.subr.mxu0 0.0
  %557 = vmatpush1.msra.mxu0 0.0
  %558 = vmatprep.subr.mxu0 0.0
  %559 = vmatpush1.msra.mxu0 0.0
  %560 = vmatprep.subr.mxu0 0.0
  %561 = vmatpush1.msra.mxu0 0.0
  %562 = vmatprep.subr.mxu0 0.0
  %563 = vmatpush1.msra.mxu0 0.0
  %564 = vmatprep.subr.mxu0 0.0
  %565 = vmatpush1.msra.mxu0 0.0
  %566 = vmatprep.subr.mxu0 0.0
  %567 = vmatpush1.msra.mxu0 0.0
  %568 = vmatprep.subr.mxu0 0.0
  %569 = vmatpush1.msra.mxu0 0.0
  %570 = vmatprep.subr.mxu0 0.0
  %571 = vmatpush1.msra.mxu0 0.0
  %572 = vmatprep.subr.mxu0 0.0
  %573 = vmatpush1.msra.mxu0 0.0
  %574 = vmatprep.subr.mxu0 0.0
  %575 = vmatpush1.msra.mxu0 0.0
  %576 = vmatprep.subr.mxu0 0.0
  %577 = vmatpush1.msra.mxu0 0.0
  %578 = vmatprep.subr.mxu0 0.0
  %579 = vmatpush1.msra.mxu0 0.0
  %580 = vmatprep.subr.mxu0 0.0
  %581 = vmatpush1.msra.mxu0 0.0
  %582 = vmatprep.subr.mxu0 0.0
  %583 = vmatpush1.msra.mxu0 0.0
  %584 = vmatprep.subr.mxu0 0.0
  %585 = vmatpush1.msra.mxu0 0.0
  %586 = vmatprep.subr.mxu0 0.0
  %587 = vmatpush1.msra.mxu0 0.0
  %588 = vmatprep.mubr.f32.mxu0 0.0
  %589 = vmatmul.mubr.f32.gmra.mrb[0].mxu0 %v522
  %v590 = vpop.f32.mrb[0].mxu0
  %v591 = vadd.f32 %v520, %v590
  %v592 = vpop.f32.mrb[0].mxu0
  %593 = vdwg.mxu0
  %v594 = vtanh.pop %v591
  %v595 = vmul.f32 %v517, %v594
  %v596 = vmul.f32 %v518, %v519
  %v597 = vadd.f32 %v595, %v596
  %v598 = vmul.f32 %v505, %v518
  %v600 = vrot.slane %v598, 6
  %v602 = vadd.f32 %v520, %v600
  %v604 = vrot.slane %v602, 2
  %v607 = vsel %vm55, %v597, 0
  %609 = vmatprep.subr.mxu0 0.0
  %610 = vmatpush1.msra.mxu0 %v421
  %611 = vmatprep.subr.mxu0 0.0
  %612 = vmatpush1.msra.mxu0 %v422
  %613 = vmatprep.subr.mxu0 0.0
  %614 = vmatpush1.msra.mxu0 %v423
  %615 = vmatprep.subr.mxu0 0.0
  %616 = vmatpush1.msra.mxu0 %v424
  %617 = vmatprep.subr.mxu0 0.0
  %618 = vmatpush1.msra.mxu0 %v425
  %619 = vmatprep.subr.mxu0 0.0
  %620 = vmatpush1.msra.mxu0 %v426
  %621 = vmatprep.subr.mxu0 0.0
  %622 = vmatpush1.msra.mxu0 %v427
  %623 = vmatprep.subr.mxu0 0.0
  %624 = vmatpush1.msra.mxu0 %v428
  %625 = vmatprep.subr.mxu0 0.0
  %626 = vmatpush1.msra.mxu0 0.0
  %627 = vmatprep.subr.mxu0 0.0
  %628 = vmatpush1.msra.mxu0 0.0
  %629 = vmatprep.subr.mxu0 0.0
  %630 = vmatpush1.msra.mxu0 0.0
  %631 = vmatprep.subr.mxu0 0.0
  %632 = vmatpush1.msra.mxu0 0.0
  %633 = vmatprep.subr.mxu0 0.0
  %634 = vmatpush1.msra.mxu0 0.0
  %635 = vmatprep.subr.mxu0 0.0
  %636 = vmatpush1.msra.mxu0 0.0
  %637 = vmatprep.subr.mxu0 0.0
  %638 = vmatpush1.msra.mxu0 0.0
  %639 = vmatprep.subr.mxu0 0.0
  %640 = vmatpush1.msra.mxu0 0.0
  %641 = vmatprep.subr.mxu0 0.0
  %642 = vmatpush1.msra.mxu0 0.0
  %643 = vmatprep.subr.mxu0 0.0
  %644 = vmatpush1.msra.mxu0 0.0
  %645 = vmatprep.subr.mxu0 0.0
  %646 = vmatpush1.msra.mxu0 0.0
  %647 = vmatprep.subr.mxu0 0.0
  %648 = vmatpush1.msra.mxu0 0.0
  %649 = vmatprep.subr.mxu0 0.0
  %650 = vmatpush1.msra.mxu0 0.0
  %651 = vmatprep.subr.mxu0 0.0
  %652 = vmatpush1.msra.mxu0 0.0
  %653 = vmatprep.subr.mxu0 0.0
  %654 = vmatpush1.msra.mxu0 0.0
  %655 = vmatprep.subr.mxu0 0.0
  %656 = vmatpush1.msra.mxu0 0.0
  %657 = vmatprep.subr.mxu0 0.0
  %658 = vmatpush1.msra.mxu0 0.0
  %659 = vmatprep.subr.mxu0 0.0
  %660 = vmatpush1.msra.mxu0 0.0
  %661 = vmatprep.subr.mxu0 0.0
  %662 = vmatpush1.msra.mxu0 0.0
  %663 = vmatprep.subr.mxu0 0.0
  %664 = vmatpush1.msra.mxu0 0.0
  %665 = vmatprep.subr.mxu0 0.0
  %666 = vmatpush1.msra.mxu0 0.0
  %667 = vmatprep.subr.mxu0 0.0
  %668 = vmatpush1.msra.mxu0 0.0
  %669 = vmatprep.subr.mxu0 0.0
  %670 = vmatpush1.msra.mxu0 0.0
  %671 = vmatprep.subr.mxu0 0.0
  %672 = vmatpush1.msra.mxu0 0.0
  %673 = vmatprep.mubr.f32.mxu0 0.0
  %674 = vmatmul.mubr.f32.gmra.mrb[0].mxu0 %v607
  %v675 = vpop.f32.mrb[0].mxu0
  %v676 = vadd.f32 %v604, %v675
  %v677 = vpop.f32.mrb[0].mxu0
  %678 = vdwg.mxu0
  %v679 = vtanh.pop %v676
  %v680 = vrot.slane %v602, 4
  %v683 = vsel %vm55, %v679, 0
  %685 = vmatprep.subr.mxu0 0.0
  %686 = vmatpush1.msra.mxu0 %v421
  %687 = vmatprep.subr.mxu0 0.0
  %688 = vmatpush1.msra.mxu0 %v422
  %689 = vmatprep.subr.mxu0 0.0
  %690 = vmatpush1.msra.mxu0 %v423
  %691 = vmatprep.subr.mxu0 0.0
  %692 = vmatpush1.msra.mxu0 %v424
  %693 = vmatprep.subr.mxu0 0.0
  %694 = vmatpush1.msra.mxu0 %v425
  %695 = vmatprep.subr.mxu0 0.0
  %696 = vmatpush1.msra.mxu0 %v426
  %697 = vmatprep.subr.mxu0 0.0
  %698 = vmatpush1.msra.mxu0 %v427
  %699 = vmatprep.subr.mxu0 0.0
  %700 = vmatpush1.msra.mxu0 %v428
  %701 = vmatprep.subr.mxu0 0.0
  %702 = vmatpush1.msra.mxu0 0.0
  %703 = vmatprep.subr.mxu0 0.0
  %704 = vmatpush1.msra.mxu0 0.0
  %705 = vmatprep.subr.mxu0 0.0
  %706 = vmatpush1.msra.mxu0 0.0
  %707 = vmatprep.subr.mxu0 0.0
  %708 = vmatpush1.msra.mxu0 0.0
  %709 = vmatprep.subr.mxu0 0.0
  %710 = vmatpush1.msra.mxu0 0.0
  %711 = vmatprep.subr.mxu0 0.0
  %712 = vmatpush1.msra.mxu0 0.0
  %713 = vmatprep.subr.mxu0 0.0
  %714 = vmatpush1.msra.mxu0 0.0
  %715 = vmatprep.subr.mxu0 0.0
  %716 = vmatpush1.msra.mxu0 0.0
  %717 = vmatprep.subr.mxu0 0.0
  %718 = vmatpush1.msra.mxu0 0.0
  %719 = vmatprep.subr.mxu0 0.0
  %720 = vmatpush1.msra.mxu0 0.0
  %721 = vmatprep.subr.mxu0 0.0
  %722 = vmatpush1.msra.mxu0 0.0
  %723 = vmatprep.subr.mxu0 0.0
  %724 = vmatpush1.msra.mxu0 0.0
  %725 = vmatprep.subr.mxu0 0.0
  %726 = vmatpush1.msra.mxu0 0.0
  %727 = vmatprep.subr.mxu0 0.0
  %728 = vmatpush1.msra.mxu0 0.0
  %729 = vmatprep.subr.mxu0 0.0
  %730 = vmatpush1.msra.mxu0 0.0
  %731 = vmatprep.subr.mxu0 0.0
  %732 = vmatpush1.msra.mxu0 0.0
  %733 = vmatprep.subr.mxu0 0.0
  %734 = vmatpush1.msra.mxu0 0.0
  %735 = vmatprep.subr.mxu0 0.0
  %736 = vmatpush1.msra.mxu0 0.0
  %737 = vmatprep.subr.mxu0 0.0
  %738 = vmatpush1.msra.mxu0 0.0
  %739 = vmatprep.subr.mxu0 0.0
  %740 = vmatpush1.msra.mxu0 0.0
  %741 = vmatprep.subr.mxu0 0.0
  %742 = vmatpush1.msra.mxu0 0.0
  %743 = vmatprep.subr.mxu0 0.0
  %744 = vmatpush1.msra.mxu0 0.0
  %745 = vmatprep.subr.mxu0 0.0
  %746 = vmatpush1.msra.mxu0 0.0
  %747 = vmatprep.subr.mxu0 0.0
  %748 = vmatpush1.msra.mxu0 0.0
  %749 = vmatprep.mubr.f32.mxu0 0.0
  %750 = vmatmul.mubr.f32.gmra.mrb[0].mxu0 %v683
  %v751 = vpop.f32.mrb[0].mxu0
  %v752 = vadd.f32 %v680, %v751
  %v753 = vpop.f32.mrb[0].mxu0
  %754 = vdwg.mxu0
  %v755 = vtanh.pop %v752
  %v756 = vrot.slane %v602, 6
  %v759 = vsel %vm55, %v755, 0
  %761 = vmatprep.subr.mxu0 0.0
  %762 = vmatpush1.msra.mxu0 %v421
  %763 = vmatprep.subr.mxu0 0.0
  %764 = vmatpush1.msra.mxu0 %v422
  %765 = vmatprep.subr.mxu0 0.0
  %766 = vmatpush1.msra.mxu0 %v423
  %767 = vmatprep.subr.mxu0 0.0
  %768 = vmatpush1.msra.mxu0 %v424
  %769 = vmatprep.subr.mxu0 0.0
  %770 = vmatpush1.msra.mxu0 %v425
  %771 = vmatprep.subr.mxu0 0.0
  %772 = vmatpush1.msra.mxu0 %v426
  %773 = vmatprep.subr.mxu0 0.0
  %774 = vmatpush1.msra.mxu0 %v427
  %775 = vmatprep.subr.mxu0 0.0
  %776 = vmatpush1.msra.mxu0 %v428
  %777 = vmatprep.subr.mxu0 0.0
  %778 = vmatpush1.msra.mxu0 0.0
  %779 = vmatprep.subr.mxu0 0.0
  %780 = vmatpush1.msra.mxu0 0.0
  %781 = vmatprep.subr.mxu0 0.0
  %782 = vmatpush1.msra.mxu0 0.0
  %783 = vmatprep.subr.mxu0 0.0
  %784 = vmatpush1.msra.mxu0 0.0
  %785 = vmatprep.subr.mxu0 0.0
  %786 = vmatpush1.msra.mxu0 0.0
  %787 = vmatprep.subr.mxu0 0.0
  %788 = vmatpush1.msra.mxu0 0.0
  %789 = vmatprep.subr.mxu0 0.0
  %790 = vmatpush1.msra.mxu0 0.0
  %791 = vmatprep.subr.mxu0 0.0
  %792 = vmatpush1.msra.mxu0 0.0
  %793 = vmatprep.subr.mxu0 0.0
  %794 = vmatpush1.msra.mxu0 0.0
  %795 = vmatprep.subr.mxu0 0.0
  %796 = vmatpush1.msra.mxu0 0.0
  %797 = vmatprep.subr.mxu0 0.0
  %798 = vmatpush1.msra.mxu0 0.0
  %799 = vmatprep.subr.mxu0 0.0
  %800 = vmatpush1.msra.mxu0 0.0
  %801 = vmatprep.subr.mxu0 0.0
  %802 = vmatpush1.msra.mxu0 0.0
  %803 = vmatprep.subr.mxu0 0.0
  %804 = vmatpush1.msra.mxu0 0.0
  %805 = vmatprep.subr.mxu0 0.0
  %806 = vmatpush1.msra.mxu0 0.0
  %807 = vmatprep.subr.mxu0 0.0
  %808 = vmatpush1.msra.mxu0 0.0
  %809 = vmatprep.subr.mxu0 0.0
  %810 = vmatpush1.msra.mxu0 0.0
  %811 = vmatprep.subr.mxu0 0.0
  %812 = vmatpush1.msra.mxu0 0.0
  %813 = vmatprep.subr.mxu0 0.0
  %814 = vmatpush1.msra.mxu0 0.0
  %815 = vmatprep.subr.mxu0 0.0
  %816 = vmatpush1.msra.mxu0 0.0
  %817 = vmatprep.subr.mxu0 0.0
  %818 = vmatpush1.msra.mxu0 0.0
  %819 = vmatprep.subr.mxu0 0.0
  %820 = vmatpush1.msra.mxu0 0.0
  %821 = vmatprep.subr.mxu0 0.0
  %822 = vmatpush1.msra.mxu0 0.0
  %823 = vmatprep.subr.mxu0 0.0
  %824 = vmatpush1.msra.mxu0 0.0
  %825 = vmatprep.mubr.f32.mxu0 0.0
  %826 = vmatmul.mubr.f32.gmra.mrb[0].mxu0 %v759
  %v827 = vpop.f32.mrb[0].mxu0
  %v828 = vadd.f32 %v756, %v827
  %v829 = vpop.f32.mrb[0].mxu0
  %830 = vdwg.mxu0
  %v831 = vtanh.pop %v828
  %v832 = vmul.f32 %v510, %v517
  %v833 = vadd.f32 %v832, %v600
  %v835 = vsel %vm55, %v831, 0
  %837 = vmatprep.subr.mxu0 0.0
  %838 = vmatpush1.msra.mxu0 %v421
  %839 = vmatprep.subr.mxu0 0.0
  %840 = vmatpush1.msra.mxu0 %v422
  %841 = vmatprep.subr.mxu0 0.0
  %842 = vmatpush1.msra.mxu0 %v423
  %843 = vmatprep.subr.mxu0 0.0
  %844 = vmatpush1.msra.mxu0 %v424
  %845 = vmatprep.subr.mxu0 0.0
  %846 = vmatpush1.msra.mxu0 %v425
  %847 = vmatprep.subr.mxu0 0.0
  %848 = vmatpush1.msra.mxu0 %v426
  %849 = vmatprep.subr.mxu0 0.0
  %850 = vmatpush1.msra.mxu0 %v427
  %851 = vmatprep.subr.mxu0 0.0
  %852 = vmatpush1.msra.mxu0 %v428
  %853 = vmatprep.subr.mxu0 0.0
  %854 = vmatpush1.msra.mxu0 0.0
  %855 = vmatprep.subr.mxu0 0.0
  %856 = vmatpush1.msra.mxu0 0.0
  %857 = vmatprep.subr.mxu0 0.0
  %858 = vmatpush1.msra.mxu0 0.0
  %859 = vmatprep.subr.mxu0 0.0
  %860 = vmatpush1.msra.mxu0 0.0
  %861 = vmatprep.subr.mxu0 0.0
  %862 = vmatpush1.msra.mxu0 0.0
  %863 = vmatprep.subr.mxu0 0.0
  %864 = vmatpush1.msra.mxu0 0.0
  %865 = vmatprep.subr.mxu0 0.0
  %866 = vmatpush1.msra.mxu0 0.0
  %867 = vmatprep.subr.mxu0 0.0
  %868 = vmatpush1.msra.mxu0 0.0
  %869 = vmatprep.subr.mxu0 0.0
  %870 = vmatpush1.msra.mxu0 0.0
  %871 = vmatprep.subr.mxu0 0.0
  %872 = vmatpush1.msra.mxu0 0.0
  %873 = vmatprep.subr.mxu0 0.0
  %874 = vmatpush1.msra.mxu0 0.0
  %875 = vmatprep.subr.mxu0 0.0
  %876 = vmatpush1.msra.mxu0 0.0
  %877 = vmatprep.subr.mxu0 0.0
  %878 = vmatpush1.msra.mxu0 0.0
  %879 = vmatprep.subr.mxu0 0.0
  %880 = vmatpush1.msra.mxu0 0.0
  %881 = vmatprep.subr.mxu0 0.0
  %882 = vmatpush1.msra.mxu0 0.0
  %883 = vmatprep.subr.mxu0 0.0
  %884 = vmatpush1.msra.mxu0 0.0
  %885 = vmatprep.subr.mxu0 0.0
  %886 = vmatpush1.msra.mxu0 0.0
  %887 = vmatprep.subr.mxu0 0.0
  %888 = vmatpush1.msra.mxu0 0.0
  %889 = vmatprep.subr.mxu0 0.0
  %890 = vmatpush1.msra.mxu0 0.0
  %891 = vmatprep.subr.mxu0 0.0
  %892 = vmatpush1.msra.mxu0 0.0
  %893 = vmatprep.subr.mxu0 0.0
  %894 = vmatpush1.msra.mxu0 0.0
  %895 = vmatprep.subr.mxu0 0.0
  %896 = vmatpush1.msra.mxu0 0.0
  %897 = vmatprep.subr.mxu0 0.0
  %898 = vmatpush1.msra.mxu0 0.0
  %899 = vmatprep.subr.mxu0 0.0
  %900 = vmatpush1.msra.mxu0 0.0
  %901 = vmatprep.mubr.f32.mxu0 0.0
  %902 = vmatmul.mubr.f32.gmra.mrb[0].mxu0 %v835
  %v903 = vpop.f32.mrb[0].mxu0
  %v904 = vadd.f32 %v833, %v903
  %v905 = vpop.f32.mrb[0].mxu0
  %906 = vdwg.mxu0
  %v907 = vtanh.pop %v904
  %v908 = vmul.f32 %v510, %v518
  %v910 = vrot.slane %v908, 6
  %v912 = vadd.f32 %v832, %v910
  %v914 = vrot.slane %v912, 2
  %v917 = vsel %vm55, %v907, 0
  %919 = vmatprep.subr.mxu0 0.0
  %920 = vmatpush1.msra.mxu0 %v421
  %921 = vmatprep.subr.mxu0 0.0
  %922 = vmatpush1.msra.mxu0 %v422
  %923 = vmatprep.subr.mxu0 0.0
  %924 = vmatpush1.msra.mxu0 %v423
  %925 = vmatprep.subr.mxu0 0.0
  %926 = vmatpush1.msra.mxu0 %v424
  %927 = vmatprep.subr.mxu0 0.0
  %928 = vmatpush1.msra.mxu0 %v425
  %929 = vmatprep.subr.mxu0 0.0
  %930 = vmatpush1.msra.mxu0 %v426
  %931 = vmatprep.subr.mxu0 0.0
  %932 = vmatpush1.msra.mxu0 %v427
  %933 = vmatprep.subr.mxu0 0.0
  %934 = vmatpush1.msra.mxu0 %v428
  %935 = vmatprep.subr.mxu0 0.0
  %936 = vmatpush1.msra.mxu0 0.0
  %937 = vmatprep.subr.mxu0 0.0
  %938 = vmatpush1.msra.mxu0 0.0
  %939 = vmatprep.subr.mxu0 0.0
  %940 = vmatpush1.msra.mxu0 0.0
  %941 = vmatprep.subr.mxu0 0.0
  %942 = vmatpush1.msra.mxu0 0.0
  %943 = vmatprep.subr.mxu0 0.0
  %944 = vmatpush1.msra.mxu0 0.0
  %945 = vmatprep.subr.mxu0 0.0
  %946 = vmatpush1.msra.mxu0 0.0
  %947 = vmatprep.subr.mxu0 0.0
  %948 = vmatpush1.msra.mxu0 0.0
  %949 = vmatprep.subr.mxu0 0.0
  %950 = vmatpush1.msra.mxu0 0.0
  %951 = vmatprep.subr.mxu0 0.0
  %952 = vmatpush1.msra.mxu0 0.0
  %953 = vmatprep.subr.mxu0 0.0
  %954 = vmatpush1.msra.mxu0 0.0
  %955 = vmatprep.subr.mxu0 0.0
  %956 = vmatpush1.msra.mxu0 0.0
  %957 = vmatprep.subr.mxu0 0.0
  %958 = vmatpush1.msra.mxu0 0.0
  %959 = vmatprep.subr.mxu0 0.0
  %960 = vmatpush1.msra.mxu0 0.0
  %961 = vmatprep.subr.mxu0 0.0
  %962 = vmatpush1.msra.mxu0 0.0
  %963 = vmatprep.subr.mxu0 0.0
  %964 = vmatpush1.msra.mxu0 0.0
  %965 = vmatprep.subr.mxu0 0.0
  %966 = vmatpush1.msra.mxu0 0.0
  %967 = vmatprep.subr.mxu0 0.0
  %968 = vmatpush1.msra.mxu0 0.0
  %969 = vmatprep.subr.mxu0 0.0
  %970 = vmatpush1.msra.mxu0 0.0
  %971 = vmatprep.subr.mxu0 0.0
  %972 = vmatpush1.msra.mxu0 0.0
  %973 = vmatprep.subr.mxu0 0.0
  %974 = vmatpush1.msra.mxu0 0.0
  %975 = vmatprep.subr.mxu0 0.0
  %976 = vmatpush1.msra.mxu0 0.0
  %977 = vmatprep.subr.mxu0 0.0
  %978 = vmatpush1.msra.mxu0 0.0
  %979 = vmatprep.subr.mxu0 0.0
  %980 = vmatpush1.msra.mxu0 0.0
  %981 = vmatprep.subr.mxu0 0.0
  %982 = vmatpush1.msra.mxu0 0.0
  %983 = vmatprep.mubr.f32.mxu0 0.0
  %984 = vmatmul.mubr.f32.gmra.mrb[0].mxu0 %v917
  %v985 = vpop.f32.mrb[0].mxu0
  %v986 = vadd.f32 %v914, %v985
  %v987 = vpop.f32.mrb[0].mxu0
  %988 = vdwg.mxu0
  %v989 = vtanh.pop %v986
  %v990 = vrot.slane %v912, 4
  %v993 = vsel %vm55, %v989, 0
  %995 = vmatprep.subr.mxu0 0.0
  %996 = vmatpush1.msra.mxu0 %v421
  %997 = vmatprep.subr.mxu0 0.0
  %998 = vmatpush1.msra.mxu0 %v422
  %999 = vmatprep.subr.mxu0 0.0
  %1000 = vmatpush1.msra.mxu0 %v423
  %1001 = vmatprep.subr.mxu0 0.0
  %1002 = vmatpush1.msra.mxu0 %v424
  %1003 = vmatprep.subr.mxu0 0.0
  %1004 = vmatpush1.msra.mxu0 %v425
  %1005 = vmatprep.subr.mxu0 0.0
  %1006 = vmatpush1.msra.mxu0 %v426
  %1007 = vmatprep.subr.mxu0 0.0
  %1008 = vmatpush1.msra.mxu0 %v427
  %1009 = vmatprep.subr.mxu0 0.0
  %1010 = vmatpush1.msra.mxu0 %v428
  %1011 = vmatprep.subr.mxu0 0.0
  %1012 = vmatpush1.msra.mxu0 0.0
  %1013 = vmatprep.subr.mxu0 0.0
  %1014 = vmatpush1.msra.mxu0 0.0
  %1015 = vmatprep.subr.mxu0 0.0
  %1016 = vmatpush1.msra.mxu0 0.0
  %1017 = vmatprep.subr.mxu0 0.0
  %1018 = vmatpush1.msra.mxu0 0.0
  %1019 = vmatprep.subr.mxu0 0.0
  %1020 = vmatpush1.msra.mxu0 0.0
  %1021 = vmatprep.subr.mxu0 0.0
  %1022 = vmatpush1.msra.mxu0 0.0
  %1023 = vmatprep.subr.mxu0 0.0
  %1024 = vmatpush1.msra.mxu0 0.0
  %1025 = vmatprep.subr.mxu0 0.0
  %1026 = vmatpush1.msra.mxu0 0.0
  %1027 = vmatprep.subr.mxu0 0.0
  %1028 = vmatpush1.msra.mxu0 0.0
  %1029 = vmatprep.subr.mxu0 0.0
  %1030 = vmatpush1.msra.mxu0 0.0
  %1031 = vmatprep.subr.mxu0 0.0
  %1032 = vmatpush1.msra.mxu0 0.0
  %1033 = vmatprep.subr.mxu0 0.0
  %1034 = vmatpush1.msra.mxu0 0.0
  %1035 = vmatprep.subr.mxu0 0.0
  %1036 = vmatpush1.msra.mxu0 0.0
  %1037 = vmatprep.subr.mxu0 0.0
  %1038 = vmatpush1.msra.mxu0 0.0
  %1039 = vmatprep.subr.mxu0 0.0
  %1040 = vmatpush1.msra.mxu0 0.0
  %1041 = vmatprep.subr.mxu0 0.0
  %1042 = vmatpush1.msra.mxu0 0.0
  %1043 = vmatprep.subr.mxu0 0.0
  %1044 = vmatpush1.msra.mxu0 0.0
  %1045 = vmatprep.subr.mxu0 0.0
  %1046 = vmatpush1.msra.mxu0 0.0
  %1047 = vmatprep.subr.mxu0 0.0
  %1048 = vmatpush1.msra.mxu0 0.0
  %1049 = vmatprep.subr.mxu0 0.0
  %1050 = vmatpush1.msra.mxu0 0.0
  %1051 = vmatprep.subr.mxu0 0.0
  %1052 = vmatpush1.msra.mxu0 0.0
  %1053 = vmatprep.subr.mxu0 0.0
  %1054 = vmatpush1.msra.mxu0 0.0
  %1055 = vmatprep.subr.mxu0 0.0
  %1056 = vmatpush1.msra.mxu0 0.0
  %1057 = vmatprep.subr.mxu0 0.0
  %1058 = vmatpush1.msra.mxu0 0.0
  %1059 = vmatprep.mubr.f32.mxu0 0.0
  %1060 = vmatmul.mubr.f32.gmra.mrb[0].mxu0 %v993
  %v1061 = vpop.f32.mrb[0].mxu0
  %v1062 = vadd.f32 %v990, %v1061
  %v1063 = vpop.f32.mrb[0].mxu0
  %1064 = vdwg.mxu0
  %v1065 = vtanh.pop %v1062
  %v1066 = vrot.slane %v912, 6
  %v1069 = vsel %vm55, %v1065, 0
  %1071 = vmatprep.subr.mxu0 0.0
  %1072 = vmatpush1.msra.mxu0 %v421
  %1073 = vmatprep.subr.mxu0 0.0
  %1074 = vmatpush1.msra.mxu0 %v422
  %1075 = vmatprep.subr.mxu0 0.0
  %1076 = vmatpush1.msra.mxu0 %v423
  %1077 = vmatprep.subr.mxu0 0.0
  %1078 = vmatpush1.msra.mxu0 %v424
  %1079 = vmatprep.subr.mxu0 0.0
  %1080 = vmatpush1.msra.mxu0 %v425
  %1081 = vmatprep.subr.mxu0 0.0
  %1082 = vmatpush1.msra.mxu0 %v426
  %1083 = vmatprep.subr.mxu0 0.0
  %1084 = vmatpush1.msra.mxu0 %v427
  %1085 = vmatprep.subr.mxu0 0.0
  %1086 = vmatpush1.msra.mxu0 %v428
  %1087 = vmatprep.subr.mxu0 0.0
  %1088 = vmatpush1.msra.mxu0 0.0
  %1089 = vmatprep.subr.mxu0 0.0
  %1090 = vmatpush1.msra.mxu0 0.0
  %1091 = vmatprep.subr.mxu0 0.0
  %1092 = vmatpush1.msra.mxu0 0.0
  %1093 = vmatprep.subr.mxu0 0.0
  %1094 = vmatpush1.msra.mxu0 0.0
  %1095 = vmatprep.subr.mxu0 0.0
  %1096 = vmatpush1.msra.mxu0 0.0
  %1097 = vmatprep.subr.mxu0 0.0
  %1098 = vmatpush1.msra.mxu0 0.0
  %1099 = vmatprep.subr.mxu0 0.0
  %1100 = vmatpush1.msra.mxu0 0.0
  %1101 = vmatprep.subr.mxu0 0.0
  %1102 = vmatpush1.msra.mxu0 0.0
  %1103 = vmatprep.subr.mxu0 0.0
  %1104 = vmatpush1.msra.mxu0 0.0
  %1105 = vmatprep.subr.mxu0 0.0
  %1106 = vmatpush1.msra.mxu0 0.0
  %1107 = vmatprep.subr.mxu0 0.0
  %1108 = vmatpush1.msra.mxu0 0.0
  %1109 = vmatprep.subr.mxu0 0.0
  %1110 = vmatpush1.msra.mxu0 0.0
  %1111 = vmatprep.subr.mxu0 0.0
  %1112 = vmatpush1.msra.mxu0 0.0
  %1113 = vmatprep.subr.mxu0 0.0
  %1114 = vmatpush1.msra.mxu0 0.0
  %1115 = vmatprep.subr.mxu0 0.0
  %1116 = vmatpush1.msra.mxu0 0.0
  %1117 = vmatprep.subr.mxu0 0.0
  %1118 = vmatpush1.msra.mxu0 0.0
  %1119 = vmatprep.subr.mxu0 0.0
  %1120 = vmatpush1.msra.mxu0 0.0
  %1121 = vmatprep.subr.mxu0 0.0
  %1122 = vmatpush1.msra.mxu0 0.0
  %1123 = vmatprep.subr.mxu0 0.0
  %1124 = vmatpush1.msra.mxu0 0.0
  %1125 = vmatprep.subr.mxu0 0.0
  %1126 = vmatpush1.msra.mxu0 0.0
  %1127 = vmatprep.subr.mxu0 0.0
  %1128 = vmatpush1.msra.mxu0 0.0
  %1129 = vmatprep.subr.mxu0 0.0
  %1130 = vmatpush1.msra.mxu0 0.0
  %1131 = vmatprep.subr.mxu0 0.0
  %1132 = vmatpush1.msra.mxu0 0.0
  %1133 = vmatprep.subr.mxu0 0.0
  %1134 = vmatpush1.msra.mxu0 0.0
  %1135 = vmatprep.mubr.f32.mxu0 0.0
  %1136 = vmatmul.mubr.f32.gmra.mrb[0].mxu0 %v1069
  %v1137 = vpop.f32.mrb[0].mxu0
  %v1138 = vadd.f32 %v1066, %v1137
  %v1139 = vpop.f32.mrb[0].mxu0
  %1140 = vdwg.mxu0
  %v1141 = vtanh.pop %v1138
  %v1143 = vsel %vm55, %v1141, 0
  %1145 = vmatprep.subr.mxu0 0.0
  %1146 = vmatpush1.msra.mxu0 %v421
  %1147 = vmatprep.subr.mxu0 0.0
  %1148 = vmatpush1.msra.mxu0 %v422
  %1149 = vmatprep.subr.mxu0 0.0
  %1150 = vmatpush1.msra.mxu0 %v423
  %1151 = vmatprep.subr.mxu0 0.0
  %1152 = vmatpush1.msra.mxu0 %v424
  %1153 = vmatprep.subr.mxu0 0.0
  %1154 = vmatpush1.msra.mxu0 %v425
  %1155 = vmatprep.subr.mxu0 0.0
  %1156 = vmatpush1.msra.mxu0 %v426
  %1157 = vmatprep.subr.mxu0 0.0
  %1158 = vmatpush1.msra.mxu0 %v427
  %1159 = vmatprep.subr.mxu0 0.0
  %1160 = vmatpush1.msra.mxu0 %v428
  %1161 = vmatprep.subr.mxu0 0.0
  %1162 = vmatpush1.msra.mxu0 0.0
  %1163 = vmatprep.subr.mxu0 0.0
  %1164 = vmatpush1.msra.mxu0 0.0
  %1165 = vmatprep.subr.mxu0 0.0
  %1166 = vmatpush1.msra.mxu0 0.0
  %1167 = vmatprep.subr.mxu0 0.0
  %1168 = vmatpush1.msra.mxu0 0.0
  %1169 = vmatprep.subr.mxu0 0.0
  %1170 = vmatpush1.msra.mxu0 0.0
  %1171 = vmatprep.subr.mxu0 0.0
  %1172 = vmatpush1.msra.mxu0 0.0
  %1173 = vmatprep.subr.mxu0 0.0
  %1174 = vmatpush1.msra.mxu0 0.0
  %1175 = vmatprep.subr.mxu0 0.0
  %1176 = vmatpush1.msra.mxu0 0.0
  %1177 = vmatprep.subr.mxu0 0.0
  %1178 = vmatpush1.msra.mxu0 0.0
  %1179 = vmatprep.subr.mxu0 0.0
  %1180 = vmatpush1.msra.mxu0 0.0
  %1181 = vmatprep.subr.mxu0 0.0
  %1182 = vmatpush1.msra.mxu0 0.0
  %1183 = vmatprep.subr.mxu0 0.0
  %1184 = vmatpush1.msra.mxu0 0.0
  %1185 = vmatprep.subr.mxu0 0.0
  %1186 = vmatpush1.msra.mxu0 0.0
  %1187 = vmatprep.subr.mxu0 0.0
  %1188 = vmatpush1.msra.mxu0 0.0
  %1189 = vmatprep.subr.mxu0 0.0
  %1190 = vmatpush1.msra.mxu0 0.0
  %1191 = vmatprep.subr.mxu0 0.0
  %1192 = vmatpush1.msra.mxu0 0.0
  %1193 = vmatprep.subr.mxu0 0.0
  %1194 = vmatpush1.msra.mxu0 0.0
  %1195 = vmatprep.subr.mxu0 0.0
  %1196 = vmatpush1.msra.mxu0 0.0
  %1197 = vmatprep.subr.mxu0 0.0
  %1198 = vmatpush1.msra.mxu0 0.0
  %1199 = vmatprep.subr.mxu0 0.0
  %1200 = vmatpush1.msra.mxu0 0.0
  %1201 = vmatprep.subr.mxu0 0.0
  %1202 = vmatpush1.msra.mxu0 0.0
  %1203 = vmatprep.subr.mxu0 0.0
  %1204 = vmatpush1.msra.mxu0 0.0
  %1205 = vmatprep.subr.mxu0 0.0
  %1206 = vmatpush1.msra.mxu0 0.0
  %1207 = vmatprep.subr.mxu0 0.0
  %1208 = vmatpush1.msra.mxu0 0.0
  %1209 = vmatprep.mubr.f32.mxu0 0.0
  %1210 = vmatmul.mubr.f32.gmra.mrb[0].mxu0 %v1143
  %v1211 = vpop.f32.mrb[0].mxu0
  %v1212 = vadd.f32 %v910, %v1211
  %v1213 = vpop.f32.mrb[0].mxu0
  %1214 = vdwg.mxu0
  %v1215 = vtanh.pop %v1212
  %v1216 = vmul.f32 %v517, %v1141
  %v1217 = vmul.f32 %v518, %v1215
  %v1218 = vadd.f32 %v1216, %v1217
  %vm1219 = vcmask 517120
  %1220 = vst.msk [vmem:[%s7] sm:$0x3] %vm1219, %v1218
  %v1221 = vadd.f32 %v415, %v597
  %1222 = vrot.lane.b32.xlu0 %v679, 96
  %v1223 = vpop.permute.xlu0 %1222
  %v1225 = vadd.f32 %v1221, %v1223
  %vm1226 = vcmask 254976
  %1227 = vst.msk [vmem:[#allocation2] sm:$0x3] %vm1226, %v1225
  %v1228 = vrot.slane %v679, 6
  %v1230 = vadd.f32 %v415, %v1228
  %v1231 = vrot.slane %v755, 6
  %1232 = vrot.lane.b32.xlu0 %v1231, 96
  %v1233 = vpop.permute.xlu0 %1232
  %v1235 = vadd.f32 %v1230, %v1233
  %vm1236 = vcmask 257026
  %1237 = vst.msk [vmem:[#allocation2] sm:$0xc] %vm1236, %v1235
  %v1238 = vrot.slane %v755, 4
  %v1240 = vadd.f32 %v415, %v1238
  %v1241 = vrot.slane %v831, 4
  %1242 = vrot.lane.b32.xlu0 %v1241, 96
  %v1243 = vpop.permute.xlu0 %1242
  %v1245 = vadd.f32 %v1240, %v1243
  %vm1246 = vcmask 259076
  %1247 = vst.msk [vmem:[#allocation2] sm:$0x30] %vm1246, %v1245
  %v1248 = vrot.slane %v831, 2
  %v1250 = vadd.f32 %v415, %v1248
  %v1251 = vrot.slane %v907, 2
  %1252 = vrot.lane.b32.xlu0 %v1251, 96
  %v1253 = vpop.permute.xlu0 %1252
  %v1255 = vadd.f32 %v1250, %v1253
  %vm1256 = vcmask 261126
  %1257 = vst.msk [vmem:[#allocation2] sm:$0xc0] %vm1256, %v1255
  %v1258 = vadd.f32 %v416, %v907
  %1259 = vrot.lane.b32.xlu0 %v989, 96
  %v1260 = vpop.permute.xlu0 %1259
  %v1262 = vadd.f32 %v1258, %v1260
  %1263 = vst.msk [vmem:[#allocation2 + $0x8] sm:$0x3] %vm1226, %v1262
  %v1264 = vrot.slane %v989, 6
  %v1266 = vadd.f32 %v416, %v1264
  %v1267 = vrot.slane %v1065, 6
  %1268 = vrot.lane.b32.xlu0 %v1267, 96
  %v1269 = vpop.permute.xlu0 %1268
  %v1271 = vadd.f32 %v1266, %v1269
  %1272 = vst.msk [vmem:[#allocation2 + $0x8] sm:$0xc] %vm1236, %v1271
  %v1273 = vrot.slane %v1065, 4
  %v1275 = vadd.f32 %v416, %v1273
  %v1276 = vrot.slane %v1141, 4
  %1277 = vrot.lane.b32.xlu0 %v1276, 96
  %v1278 = vpop.permute.xlu0 %1277
  %v1280 = vadd.f32 %v1275, %v1278
  %1281 = vst.msk [vmem:[#allocation2 + $0x8] sm:$0x30] %vm1246, %v1280
  %v1282 = vrot.slane %v1141, 2
  %v1284 = vadd.f32 %v416, %v1282
  %v1286 = vrot.slane %v1218, 2
  %1287 = vrot.lane.b32.xlu0 %v1286, 96
  %v1288 = vpop.permute.xlu0 %1287
  %v1290 = vadd.f32 %v1284, %v1288
  %1291 = vst.msk [vmem:[#allocation2 + $0x8] sm:$0xc0] %vm1256, %v1290
  %v1292 = vld [vmem:[%s4 + $0x90] sm:$0xff]
  %v1293 = vld [vmem:[%s4 + $0x98] sm:$0xff]
  %v1294 = vld [vmem:[%s4 + $0xa0] sm:$0xff]
  %v1295 = vld [vmem:[%s4 + $0xa8] sm:$0xff]
  %v1296 = vld [vmem:[#allocation2] sm:$0xff]
  %v1297 = vld [vmem:[#allocation2 + $0x8] sm:$0xff]
  %v1298 = vld [vmem:[%s5 + $0x2] sm:$0x1]
  %v1300 = vlaneseq
  %v1301 = vshrl.u32 %v1300, 7
  %v1302 = vsub.s32 0, %v1301
  %v1303 = vrot.slane %v1298, %v1302
  %v1306 = vsel %vm324, %v1296, 0
  %v1309 = vsel %vm324, %v1297, 0
  %1311 = vmatprep.subr.mxu0 0.0
  %1312 = vmatpush1.msra.mxu0 %v1292
  %1313 = vmatprep.subr.mxu0 0.0
  %1314 = vmatpush1.msra.mxu0 %v1293
  %1315 = vmatprep.subr.mxu0 0.0
  %1316 = vmatpush1.msra.mxu0 %v1294
  %1317 = vmatprep.subr.mxu0 0.0
  %1318 = vmatpush1.msra.mxu0 %v1295
  %1319 = vmatprep.subr.mxu0 0.0
  %1320 = vmatpush1.msra.mxu0 0.0
  %1321 = vmatprep.subr.mxu0 0.0
  %1322 = vmatpush1.msra.mxu0 0.0
  %1323 = vmatprep.subr.mxu0 0.0
  %1324 = vmatpush1.msra.mxu0 0.0
  %1325 = vmatprep.subr.mxu0 0.0
  %1326 = vmatpush1.msra.mxu0 0.0
  %1327 = vmatprep.subr.mxu0 0.0
  %1328 = vmatpush1.msra.mxu0 0.0
  %1329 = vmatprep.subr.mxu0 0.0
  %1330 = vmatpush1.msra.mxu0 0.0
  %1331 = vmatprep.subr.mxu0 0.0
  %1332 = vmatpush1.msra.mxu0 0.0
  %1333 = vmatprep.subr.mxu0 0.0
  %1334 = vmatpush1.msra.mxu0 0.0
  %1335 = vmatprep.subr.mxu0 0.0
  %1336 = vmatpush1.msra.mxu0 0.0
  %1337 = vmatprep.subr.mxu0 0.0
  %1338 = vmatpush1.msra.mxu0 0.0
  %1339 = vmatprep.subr.mxu0 0.0
  %1340 = vmatpush1.msra.mxu0 0.0
  %1341 = vmatprep.subr.mxu0 0.0
  %1342 = vmatpush1.msra.mxu0 0.0
  %1343 = vmatprep.subr.mxu0 0.0
  %1344 = vmatpush1.msra.mxu0 0.0
  %1345 = vmatprep.subr.mxu0 0.0
  %1346 = vmatpush1.msra.mxu0 0.0
  %1347 = vmatprep.subr.mxu0 0.0
  %1348 = vmatpush1.msra.mxu0 0.0
  %1349 = vmatprep.subr.mxu0 0.0
  %1350 = vmatpush1.msra.mxu0 0.0
  %1351 = vmatprep.subr.mxu0 0.0
  %1352 = vmatpush1.msra.mxu0 0.0
  %1353 = vmatprep.subr.mxu0 0.0
  %1354 = vmatpush1.msra.mxu0 0.0
  %1355 = vmatprep.subr.mxu0 0.0
  %1356 = vmatpush1.msra.mxu0 0.0
  %1357 = vmatprep.subr.mxu0 0.0
  %1358 = vmatpush1.msra.mxu0 0.0
  %1359 = vmatprep.subr.mxu0 0.0
  %1360 = vmatpush1.msra.mxu0 0.0
  %1361 = vmatprep.subr.mxu0 0.0
  %1362 = vmatpush1.msra.mxu0 0.0
  %1363 = vmatprep.subr.mxu0 0.0
  %1364 = vmatpush1.msra.mxu0 0.0
  %1365 = vmatprep.subr.mxu0 0.0
  %1366 = vmatpush1.msra.mxu0 0.0
  %1367 = vmatprep.subr.mxu0 0.0
  %1368 = vmatpush1.msra.mxu0 0.0
  %1369 = vmatprep.subr.mxu0 0.0
  %1370 = vmatpush1.msra.mxu0 0.0
  %1371 = vmatprep.subr.mxu0 0.0
  %1372 = vmatpush1.msra.mxu0 0.0
  %1373 = vmatprep.subr.mxu0 0.0
  %1374 = vmatpush1.msra.mxu0 0.0
  %1375 = vmatprep.mubr.f32.mxu0 0.0
  %1376 = vmatmul.mubr.f32.gmra.mrb[0].mxu0 %v1306
  %v1377 = vpop.f32.mrb[0].mxu0
  %v1378 = vadd.f32 %v1303, %v1377
  %v1379 = vpop.f32.mrb[0].mxu0
  %1380 = vmatprep.mubr.f32.mxu0 0.0
  %1381 = vmatmul.mubr.f32.gmra.mrb[0].mxu0 %v1309
  %v1382 = vpop.f32.mrb[0].mxu0
  %v1383 = vadd.f32 %v1303, %v1382
  %v1384 = vpop.f32.mrb[0].mxu0
  %1385 = vdwg.mxu0
  %1386 = vst [vmem:[%s6] sm:$0xff] %v1378
  %1387 = vst [vmem:[%s6 + $0x8] sm:$0xff] %v1383
  // Predicated region
  $region26: #{forward.1} parent=0 // pred_check
    _
  $region27: #{forward.1} parent=0 // pred_check_branch
    %1389 = sbr.rel (0) target = $region29
  $region28: #{forward.1} parent=0 // pred_region
    _
  $region29: #{forward.1} parent=0 // pred_fallthru
    _
  // Predicated region
  $region30: #{forward.1} parent=0 // pred_check
    _
  $region31: #{forward.1} parent=0 // pred_check_branch
    %1391 = sbr.rel (0) target = $region33
  $region32: #{forward.1} parent=0 // pred_region
    _
  $region33: #{forward.1} parent=0 // pred_fallthru
    _
  // Predicated region
  $region34: #{forward.1} parent=0 // pred_check
    _
  $region35: #{forward.1} parent=0 // pred_check_branch
    %1393 = sbr.rel (0) target = $region37
  $region36: #{forward.1} parent=0 // pred_region
    _
  $region37: #{forward.1} parent=0 // pred_fallthru
    _
  // Predicated region
  $region38: #{forward.1} parent=0 // pred_check
    _
  $region39: #{forward.1} parent=0 // pred_check_branch
    %1395 = sbr.rel (0) target = $region41
  $region40: #{forward.1} parent=0 // pred_region
    _
  $region41: #{forward.1} parent=0 // pred_fallthru
    _

</llo_original>
